<compile_context>
chip_gen: v6e
topology: v6e:2x2x1
jax: 0.10.0
libtpu: 0.0.40
codegen_flags: <defaults>
</compile_context>

<pallas_src>
import numpy as np
import jax
import jax.numpy as jnp
from jax.experimental import pallas as pl
from jax.experimental.pallas import tpu as pltpu

# ------------------------------- configuration -------------------------------
BATCH       = 4
N_FEATURES  = 16                        # <= 40 -> kernel_size = 2 ('auto' rule)
KERNEL_SIZE = 2
N_SUB       = N_FEATURES - KERNEL_SIZE + 1      # 15 real sub-vectors (windows)
N_SUB_PAD   = 16                                # padded window count (zero row)
COMP_DIM    = N_FEATURES - KERNEL_SIZE          # 14 complement features
F_CAT       = KERNEL_SIZE + COMP_DIM            # 16 (= n_features)
HIDDEN_F    = (32, 16)                  # enc_f_net hidden dims
HIDDEN_G    = (16, 8)                   # enc_g_net hidden dims (0.5 * hidden_dims)
REP_DIM     = 32
TAU         = 0.01
INV_TAU     = 1.0 / TAU
MAX_NEG     = 1000
N_NEG       = min(MAX_NEG, N_SUB)       # 15 (all negatives kept)
BN_EPS      = 1e-5
LRELU_SLOPE = 0.01                      # act = 'LeakyReLU'

# packed (block-diagonal) layer widths
C1 = HIDDEN_G[0] + HIDDEN_F[0]    # 48
C2 = HIDDEN_G[1] + HIDDEN_F[1]    # 24
C3 = 2 * REP_DIM                  # 64

# the head recovers pos from the negative score matrix -> negatives must be a full
# permutation of the windows, and the permuted output rows must fit the padded slab
assert N_NEG == N_SUB
assert 1 + N_NEG == N_SUB_PAD
assert N_SUB_PAD % 8 == 0 and (BATCH * N_SUB_PAD) % 8 == 0

# packed-weight row layout (single VMEM operand)
W1_R0, W1_R1 = 0, F_CAT                  # rows [ 0, 16) : layer-1 block-diag (16, 48)
W2_R0, W2_R1 = W1_R1, W1_R1 + C1         # rows [16, 64) : layer-2 block-diag (48, 24)
W3_R0, W3_R1 = W2_R1, W2_R1 + C2         # rows [64, 88) : layer-3 block-diag (24, 64)
W_ROWS, W_COLS = W3_R1, max(C1, C2, C3)  # (88, 64)

# ------------------------- builder index tables (static) -------------------------
_start = np.arange(N_FEATURES)[:-KERNEL_SIZE + 1]
ALL_IDX      = _start[:, None] + np.arange(KERNEL_SIZE)                   # (n_sub, K)
ALL_IDX_COMP = np.array([np.setdiff1d(np.arange(N_FEATURES), r)
                         for r in ALL_IDX])                               # (n_sub, F-K)

# deterministic stand-in for torch.randperm(n_pos)
NEG_IDX = (N_SUB - 1) - np.arange(N_SUB)                                  # (n_neg,)

# single fused + padded gather table.  Slab row s, lanes:
#   [0, K)       g-side input = sub-vector of window NEG_IDX[s-1]   (s >= 1; s = 0 pad)
#   [K, F_CAT)   f-side input = complement of window s              (s <= 14; s = 15 pad)
# The +1 row shift on the g side puts the batched dot pos x query^T directly in the
# final output-row order (row r = negative class r-1), so no concat/roll is needed.
# Pad slots point at feature 0 and are zeroed in-kernel.
CAT_IDX_PAD = np.zeros((N_SUB_PAD, F_CAT), dtype=np.int32)
CAT_IDX_PAD[1:, :KERNEL_SIZE] = ALL_IDX[NEG_IDX]
CAT_IDX_PAD[:N_SUB, KERNEL_SIZE:] = ALL_IDX_COMP


# ------------------------------- kernel helpers -------------------------------
def _mm(h3, w):
    """(B, S, Cin) @ (Cin, Cout) as ONE 2-D MXU dot via a layout-free sublane flatten."""
    b, s, cin = h3.shape
    h2 = h3.reshape(b * s, cin)
    y = jnp.dot(h2, w, preferred_element_type=jnp.float32)
    return y.reshape(b, s, w.shape[1])


def _bn_act_split(h, n_g, n_f, f_tanh):
    """Fused BatchNorm1d(affine=False, batch stats) + activation for a slab holding
    the g-encoder in lanes [0, n_g) and the f-encoder in lanes [n_g, n_g+n_f).
    Stats are per window channel over (batch, own feature range); single pass.
    Zero pad channels give mean=0, var=0 -> stay exactly zero."""
    b, s, c = h.shape
    lane = jax.lax.broadcasted_iota(jnp.int32, (1, 1, c), 2)
    g_lane = lane < n_g                                       # (1,1,C) bool

    hh = h * h
    s_all = jnp.sum(h,  axis=(0, 2), keepdims=True)           # (1, S, 1)
    q_all = jnp.sum(hh, axis=(0, 2), keepdims=True)
    s_g = jnp.sum(jnp.where(g_lane, h,  0.0), axis=(0, 2), keepdims=True)
    q_g = jnp.sum(jnp.where(g_lane, hh, 0.0), axis=(0, 2), keepdims=True)

    inv_g = 1.0 / (b * n_g)
    inv_f = 1.0 / (b * n_f)
    mean_g = s_g * inv_g
    mean_f = (s_all - s_g) * inv_f
    var_g = jnp.maximum(q_g * inv_g - mean_g * mean_g, 0.0)
    var_f = jnp.maximum((q_all - q_g) * inv_f - mean_f * mean_f, 0.0)

    mean = jnp.where(g_lane, mean_g, mean_f)                  # (1, S, C)
    var  = jnp.where(g_lane, var_g,  var_f)
    h = (h - mean) * jax.lax.rsqrt(var + BN_EPS)

    lrelu = jnp.where(h >= 0.0, h, LRELU_SLOPE * h)
    if f_tanh:                       # layer 1: f-side uses Tanh, g-side LeakyReLU
        return jnp.where(g_lane, lrelu, jnp.tanh(h))
    return lrelu


# ---------------------------------- the kernel ----------------------------------
def icl_forward_kernel(xcat_ref, w_ref, out_ref):
    x = xcat_ref[...]                                         # (B, 16, F_CAT)

    # zero the pad slots (row 0 g-lanes, row 15 f-lanes); zero rows propagate exactly
    # through the bias-free Linear/BN/activation stack and add 0 to the dim-1 L2 norm.
    row  = jax.lax.broadcasted_iota(jnp.int32, (1, N_SUB_PAD, F_CAT), 1)
    lane = jax.lax.broadcasted_iota(jnp.int32, (1, N_SUB_PAD, F_CAT), 2)
    is_pad = ((row == 0) & (lane < KERNEL_SIZE)) | \
             ((row == N_SUB_PAD - 1) & (lane >= KERNEL_SIZE))
    h = jnp.where(is_pad, 0.0, x)

    # fused block-diagonal encoders: 3 single-sequence MXU dots on (64, Cin)
    h = _mm(h, w_ref[W1_R0:W1_R1, 0:C1])                      # (B, 16, 48)
    h = _bn_act_split(h, HIDDEN_G[0], HIDDEN_F[0], f_tanh=True)
    h = _mm(h, w_ref[W2_R0:W2_R1, 0:C2])                      # (B, 16, 24)
    h = _bn_act_split(h, HIDDEN_G[1], HIDDEN_F[1], f_tanh=False)
    h = _mm(h, w_ref[W3_R0:W3_R1, 0:C3])                      # (B, 16, 64)
    h = _bn_act_split(h, REP_DIM, REP_DIM, f_tanh=False)

    # F.normalize(dim=1): per (batch, rep lane) over the window axis (pad rows add 0)
    ssq = jnp.sum(h * h, axis=1, keepdims=True)               # (B, 1, 64)
    h = h * jax.lax.rsqrt(jnp.maximum(ssq, 1e-24))

    pos_p = h[:, :, :REP_DIM]   # slab row r = normalized g-rep of window NEG_IDX[r-1]
    query = h[:, :, REP_DIM:]   # slab row i = normalized f-rep of window i

    # negT[b, r, i] = <pos[NEG_IDX[r-1]], query[i]> / tau — already in output-row order
    negT = jax.lax.dot_general(
        pos_p, query, dimension_numbers=(((2,), (2,)), ((0,), (0,))),
        preferred_element_type=jnp.float32) * INV_TAU         # (B, 16, 16)

    # self-pair positions: NEG_IDX[r-1] == i  <=>  r + i == N_SUB_PAD - 1
    rj = jax.lax.broadcasted_iota(jnp.int32, (1, N_SUB_PAD, N_SUB_PAD), 1)
    ci = jax.lax.broadcasted_iota(jnp.int32, (1, N_SUB_PAD, N_SUB_PAD), 2)
    self_pair = (rj + ci) == (N_SUB_PAD - 1)

    # positive logits (output row 0) = masked anti-diagonal reduce of negT
    pos_row = jnp.sum(jnp.where(self_pair, negT, 0.0), axis=1, keepdims=True)  # (B,1,16)

    # assemble (B, 1+n_neg, n_sub_pad) with two selects (no concat / roll), then drop
    # the pad column on store.  -inf self-pair entries match torch's masked_fill.
    logit = jnp.where(rj == 0, pos_row,
                      jnp.where(self_pair, -jnp.inf, negT))   # (B, 16, 16)
    out_ref[...] = logit[:, :, :N_SUB]                        # (B, 16, 15)


# ------------------------------------ wrapper ------------------------------------
def init_params(key):
    def lin(k, fan_in, fan_out):
        bound = 1.0 / np.sqrt(fan_in)
        return jax.random.uniform(k, (fan_in, fan_out), jnp.float32, -bound, bound)
    ks = jax.random.split(key, 6)
    # enc_g_net: K -> 16 -> 8 -> rep        enc_f_net: (F-K) -> 32 -> 16 -> rep
    wg1 = lin(ks[0], KERNEL_SIZE, HIDDEN_G[0])
    wg2 = lin(ks[1], HIDDEN_G[0], HIDDEN_G[1])
    wg3 = lin(ks[2], HIDDEN_G[1], REP_DIM)
    wf1 = lin(ks[3], COMP_DIM, HIDDEN_F[0])
    wf2 = lin(ks[4], HIDDEN_F[0], HIDDEN_F[1])
    wf3 = lin(ks[5], HIDDEN_F[1], REP_DIM)
    return (wg1, wg2, wg3, wf1, wf2, wf3)


def pack_params(params):
    """Pack the six weight matrices (block-diagonal per layer) into ONE (88, 64)
    operand so the kernel issues a single weight DMA and takes static sub-views."""
    wg1, wg2, wg3, wf1, wf2, wf3 = params
    W = jnp.zeros((W_ROWS, W_COLS), jnp.float32)
    # layer 1: (F_CAT, C1)
    W = W.at[W1_R0:W1_R0 + KERNEL_SIZE, 0:HIDDEN_G[0]].set(wg1)
    W = W.at[W1_R0 + KERNEL_SIZE:W1_R1, HIDDEN_G[0]:C1].set(wf1)
    # layer 2: (C1, C2)
    W = W.at[W2_R0:W2_R0 + HIDDEN_G[0], 0:HIDDEN_G[1]].set(wg2)
    W = W.at[W2_R0 + HIDDEN_G[0]:W2_R1, HIDDEN_G[1]:C2].set(wf2)
    # layer 3: (C2, C3)
    W = W.at[W3_R0:W3_R0 + HIDDEN_G[1], 0:REP_DIM].set(wg3)
    W = W.at[W3_R0 + HIDDEN_G[1]:W3_R1, REP_DIM:C3].set(wf3)
    return W


@jax.jit
def icl_forward(x, w_all):
    # positive_matrix_builder + negative permutation + pad-to-16 as ONE fused gather
    xcat = x[:, CAT_IDX_PAD].astype(jnp.float32)              # (B, 16, F_CAT)

    vmem = pl.BlockSpec(memory_space=pltpu.MemorySpace.VMEM)
    logit = pl.pallas_call(
        icl_forward_kernel,
        out_shape=jax.ShapeDtypeStruct((BATCH, 1 + N_NEG, N_SUB), jnp.float32),
        in_specs=[vmem, vmem],        # whole arrays in VMEM, single invocation
        out_specs=vmem,               # (full-batch BN / dim-1 norm -> no tiling)
    )(xcat, w_all)

    correct_class = jnp.zeros((BATCH, N_SUB), dtype=jnp.int32)   # torch.long -> int32
    return logit, correct_class


if __name__ == "__main__":
    key = jax.random.PRNGKey(0)
    k_x, k_w = jax.random.split(key)
    x = jax.random.normal(k_x, (BATCH, N_FEATURES), dtype=jnp.float32)
    w_all = pack_params(init_params(k_w))

    logit, correct_class = icl_forward(x, w_all)
    jax.block_until_ready(logit)
    jax.block_until_ready(correct_class)

    assert logit.shape == (BATCH, 1 + N_NEG, N_SUB)
    assert correct_class.shape == (BATCH, N_SUB)
    assert not bool(jnp.any(jnp.isnan(logit)))
    print("KERNEL_OK")
</pallas_src>

<mosaic_0001>
module attributes {stable_mosaic.version = 11 : i64} {
  func.func @icl_forward_kernel(%arg0: memref<4x16x16xf32, #tpu.memory_space<vmem>>, %arg1: memref<88x64xf32, #tpu.memory_space<vmem>>, %arg2: memref<4x16x15xf32, #tpu.memory_space<vmem>>) attributes {dimension_semantics = [], scalar_prefetch = 0 : i64, scratch_operands = 0 : i64, tpu.core_type = #tpu.core_type<tc>} {
    %c0 = arith.constant 0 : index
    %c0_0 = arith.constant 0 : index
    %c0_1 = arith.constant 0 : index
    %0 = vector.load %arg0[%c0, %c0_0, %c0_1] : memref<4x16x16xf32, #tpu.memory_space<vmem>>, vector<4x16x16xf32>
    %1 = tpu.iota {dimensions = array<i32: 1>} : vector<1x16x16xi32>
    %2 = tpu.iota {dimensions = array<i32: 2>} : vector<1x16x16xi32>
    %c0_i32 = arith.constant 0 : i32
    %3 = vector.broadcast %c0_i32 : i32 to vector<1x16x16xi32>
    %4 = arith.cmpi eq, %1, %3 : vector<1x16x16xi32>
    %c2_i32 = arith.constant 2 : i32
    %5 = vector.broadcast %c2_i32 : i32 to vector<1x16x16xi32>
    %6 = arith.cmpi slt, %2, %5 : vector<1x16x16xi32>
    %7 = arith.andi %4, %6 : vector<1x16x16xi1>
    %c15_i32 = arith.constant 15 : i32
    %8 = vector.broadcast %c15_i32 : i32 to vector<1x16x16xi32>
    %9 = arith.cmpi eq, %1, %8 : vector<1x16x16xi32>
    %c2_i32_2 = arith.constant 2 : i32
    %10 = vector.broadcast %c2_i32_2 : i32 to vector<1x16x16xi32>
    %11 = arith.cmpi sge, %2, %10 : vector<1x16x16xi32>
    %12 = arith.andi %9, %11 : vector<1x16x16xi1>
    %13 = arith.ori %7, %12 : vector<1x16x16xi1>
    %cst = arith.constant 0.000000e+00 : f32
    %14 = vector.shape_cast %13 : vector<1x16x16xi1> to vector<1x16x16xi1>
    %15 = vector.broadcast %14 : vector<1x16x16xi1> to vector<4x16x16xi1>
    %16 = vector.broadcast %cst : f32 to vector<4x16x16xf32>
    %17 = arith.select %15, %16, %0 : vector<4x16x16xi1>, vector<4x16x16xf32>
    %c0_3 = arith.constant 0 : index
    %c0_4 = arith.constant 0 : index
    %18 = vector.load %arg1[%c0_3, %c0_4] : memref<88x64xf32, #tpu.memory_space<vmem>>, vector<16x48xf32>
    %19 = vector.shape_cast %17 : vector<4x16x16xf32> to vector<64x16xf32>
    %cst_5 = arith.constant dense<0.000000e+00> : vector<64x48xf32>
    %20 = tpu.matmul %19, %18, %cst_5 {dimension_numbers = #tpu.dot_dimension_numbers<[1], [0], [0], [1], [0, 0, 1, 1], [], []>} : vector<64x16xf32>, vector<16x48xf32>, vector<64x48xf32> -> vector<64x48xf32>
    %21 = vector.shape_cast %20 : vector<64x48xf32> to vector<4x16x48xf32>
    %22 = tpu.iota {dimensions = array<i32: 2>} : vector<1x1x48xi32>
    %c16_i32 = arith.constant 16 : i32
    %23 = vector.broadcast %c16_i32 : i32 to vector<1x1x48xi32>
    %24 = arith.cmpi slt, %22, %23 : vector<1x1x48xi32>
    %25 = arith.mulf %21, %21 : vector<4x16x48xf32>
    %cst_6 = arith.constant dense<0.000000e+00> : vector<16xf32>
    %26 = vector.multi_reduction <add>, %21, %cst_6 [0, 2] : vector<4x16x48xf32> to vector<16xf32>
    %27 = vector.shape_cast %26 : vector<16xf32> to vector<1x16x1xf32>
    %cst_7 = arith.constant dense<0.000000e+00> : vector<16xf32>
    %28 = vector.multi_reduction <add>, %25, %cst_7 [0, 2] : vector<4x16x48xf32> to vector<16xf32>
    %29 = vector.shape_cast %28 : vector<16xf32> to vector<1x16x1xf32>
    %cst_8 = arith.constant 0.000000e+00 : f32
    %30 = vector.shape_cast %24 : vector<1x1x48xi1> to vector<1x1x48xi1>
    %31 = vector.broadcast %30 : vector<1x1x48xi1> to vector<4x16x48xi1>
    %32 = vector.broadcast %cst_8 : f32 to vector<4x16x48xf32>
    %33 = arith.select %31, %21, %32 : vector<4x16x48xi1>, vector<4x16x48xf32>
    %cst_9 = arith.constant dense<0.000000e+00> : vector<16xf32>
    %34 = vector.multi_reduction <add>, %33, %cst_9 [0, 2] : vector<4x16x48xf32> to vector<16xf32>
    %35 = vector.shape_cast %34 : vector<16xf32> to vector<1x16x1xf32>
    %cst_10 = arith.constant 0.000000e+00 : f32
    %36 = vector.shape_cast %24 : vector<1x1x48xi1> to vector<1x1x48xi1>
    %37 = vector.broadcast %36 : vector<1x1x48xi1> to vector<4x16x48xi1>
    %38 = vector.broadcast %cst_10 : f32 to vector<4x16x48xf32>
    %39 = arith.select %37, %25, %38 : vector<4x16x48xi1>, vector<4x16x48xf32>
    %cst_11 = arith.constant dense<0.000000e+00> : vector<16xf32>
    %40 = vector.multi_reduction <add>, %39, %cst_11 [0, 2] : vector<4x16x48xf32> to vector<16xf32>
    %41 = vector.shape_cast %40 : vector<16xf32> to vector<1x16x1xf32>
    %cst_12 = arith.constant 1.562500e-02 : f32
    %42 = vector.broadcast %cst_12 : f32 to vector<1x16x1xf32>
    %43 = arith.mulf %35, %42 : vector<1x16x1xf32>
    %44 = arith.subf %27, %35 : vector<1x16x1xf32>
    %cst_13 = arith.constant 7.812500e-03 : f32
    %45 = vector.broadcast %cst_13 : f32 to vector<1x16x1xf32>
    %46 = arith.mulf %44, %45 : vector<1x16x1xf32>
    %cst_14 = arith.constant 1.562500e-02 : f32
    %47 = vector.broadcast %cst_14 : f32 to vector<1x16x1xf32>
    %48 = arith.mulf %41, %47 : vector<1x16x1xf32>
    %49 = arith.mulf %43, %43 : vector<1x16x1xf32>
    %50 = arith.subf %48, %49 : vector<1x16x1xf32>
    %cst_15 = arith.constant 0.000000e+00 : f32
    %51 = vector.broadcast %cst_15 : f32 to vector<1x16x1xf32>
    %52 = arith.maximumf %50, %51 : vector<1x16x1xf32>
    %53 = arith.subf %29, %41 : vector<1x16x1xf32>
    %cst_16 = arith.constant 7.812500e-03 : f32
    %54 = vector.broadcast %cst_16 : f32 to vector<1x16x1xf32>
    %55 = arith.mulf %53, %54 : vector<1x16x1xf32>
    %56 = arith.mulf %46, %46 : vector<1x16x1xf32>
    %57 = arith.subf %55, %56 : vector<1x16x1xf32>
    %cst_17 = arith.constant 0.000000e+00 : f32
    %58 = vector.broadcast %cst_17 : f32 to vector<1x16x1xf32>
    %59 = arith.maximumf %57, %58 : vector<1x16x1xf32>
    %60 = vector.shape_cast %24 : vector<1x1x48xi1> to vector<1x1x48xi1>
    %61 = vector.broadcast %60 : vector<1x1x48xi1> to vector<1x16x48xi1>
    %62 = vector.shape_cast %43 : vector<1x16x1xf32> to vector<1x16x1xf32>
    %63 = vector.broadcast %62 : vector<1x16x1xf32> to vector<1x16x48xf32>
    %64 = vector.shape_cast %46 : vector<1x16x1xf32> to vector<1x16x1xf32>
    %65 = vector.broadcast %64 : vector<1x16x1xf32> to vector<1x16x48xf32>
    %66 = arith.select %61, %63, %65 : vector<1x16x48xi1>, vector<1x16x48xf32>
    %67 = vector.shape_cast %24 : vector<1x1x48xi1> to vector<1x1x48xi1>
    %68 = vector.broadcast %67 : vector<1x1x48xi1> to vector<1x16x48xi1>
    %69 = vector.shape_cast %52 : vector<1x16x1xf32> to vector<1x16x1xf32>
    %70 = vector.broadcast %69 : vector<1x16x1xf32> to vector<1x16x48xf32>
    %71 = vector.shape_cast %59 : vector<1x16x1xf32> to vector<1x16x1xf32>
    %72 = vector.broadcast %71 : vector<1x16x1xf32> to vector<1x16x48xf32>
    %73 = arith.select %68, %70, %72 : vector<1x16x48xi1>, vector<1x16x48xf32>
    %74 = vector.broadcast %66 : vector<1x16x48xf32> to vector<4x16x48xf32>
    %75 = arith.subf %21, %74 : vector<4x16x48xf32>
    %cst_18 = arith.constant 9.99999974E-6 : f32
    %76 = vector.broadcast %cst_18 : f32 to vector<1x16x48xf32>
    %77 = arith.addf %73, %76 : vector<1x16x48xf32>
    %78 = math.rsqrt %77 : vector<1x16x48xf32>
    %79 = vector.broadcast %78 : vector<1x16x48xf32> to vector<4x16x48xf32>
    %80 = arith.mulf %75, %79 : vector<4x16x48xf32>
    %cst_19 = arith.constant 0.000000e+00 : f32
    %81 = vector.broadcast %cst_19 : f32 to vector<4x16x48xf32>
    %82 = arith.cmpf oge, %80, %81 : vector<4x16x48xf32>
    %cst_20 = arith.constant 0.00999999977 : f32
    %83 = vector.broadcast %cst_20 : f32 to vector<4x16x48xf32>
    %84 = arith.mulf %83, %80 : vector<4x16x48xf32>
    %85 = arith.select %82, %80, %84 : vector<4x16x48xi1>, vector<4x16x48xf32>
    %86 = math.tanh %80 : vector<4x16x48xf32>
    %87 = vector.shape_cast %24 : vector<1x1x48xi1> to vector<1x1x48xi1>
    %88 = vector.broadcast %87 : vector<1x1x48xi1> to vector<4x16x48xi1>
    %89 = arith.select %88, %85, %86 : vector<4x16x48xi1>, vector<4x16x48xf32>
    %c16 = arith.constant 16 : index
    %c0_21 = arith.constant 0 : index
    %90 = vector.load %arg1[%c16, %c0_21] : memref<88x64xf32, #tpu.memory_space<vmem>>, vector<48x24xf32>
    %91 = vector.shape_cast %89 : vector<4x16x48xf32> to vector<64x48xf32>
    %cst_22 = arith.constant dense<0.000000e+00> : vector<64x24xf32>
    %92 = tpu.matmul %91, %90, %cst_22 {dimension_numbers = #tpu.dot_dimension_numbers<[1], [0], [0], [1], [0, 0, 1, 1], [], []>} : vector<64x48xf32>, vector<48x24xf32>, vector<64x24xf32> -> vector<64x24xf32>
    %93 = vector.shape_cast %92 : vector<64x24xf32> to vector<4x16x24xf32>
    %94 = tpu.iota {dimensions = array<i32: 2>} : vector<1x1x24xi32>
    %c8_i32 = arith.constant 8 : i32
    %95 = vector.broadcast %c8_i32 : i32 to vector<1x1x24xi32>
    %96 = arith.cmpi slt, %94, %95 : vector<1x1x24xi32>
    %97 = arith.mulf %93, %93 : vector<4x16x24xf32>
    %cst_23 = arith.constant dense<0.000000e+00> : vector<16xf32>
    %98 = vector.multi_reduction <add>, %93, %cst_23 [0, 2] : vector<4x16x24xf32> to vector<16xf32>
    %99 = vector.shape_cast %98 : vector<16xf32> to vector<1x16x1xf32>
    %cst_24 = arith.constant dense<0.000000e+00> : vector<16xf32>
    %100 = vector.multi_reduction <add>, %97, %cst_24 [0, 2] : vector<4x16x24xf32> to vector<16xf32>
    %101 = vector.shape_cast %100 : vector<16xf32> to vector<1x16x1xf32>
    %cst_25 = arith.constant 0.000000e+00 : f32
    %102 = vector.shape_cast %96 : vector<1x1x24xi1> to vector<1x1x24xi1>
    %103 = vector.broadcast %102 : vector<1x1x24xi1> to vector<4x16x24xi1>
    %104 = vector.broadcast %cst_25 : f32 to vector<4x16x24xf32>
    %105 = arith.select %103, %93, %104 : vector<4x16x24xi1>, vector<4x16x24xf32>
    %cst_26 = arith.constant dense<0.000000e+00> : vector<16xf32>
    %106 = vector.multi_reduction <add>, %105, %cst_26 [0, 2] : vector<4x16x24xf32> to vector<16xf32>
    %107 = vector.shape_cast %106 : vector<16xf32> to vector<1x16x1xf32>
    %cst_27 = arith.constant 0.000000e+00 : f32
    %108 = vector.shape_cast %96 : vector<1x1x24xi1> to vector<1x1x24xi1>
    %109 = vector.broadcast %108 : vector<1x1x24xi1> to vector<4x16x24xi1>
    %110 = vector.broadcast %cst_27 : f32 to vector<4x16x24xf32>
    %111 = arith.select %109, %97, %110 : vector<4x16x24xi1>, vector<4x16x24xf32>
    %cst_28 = arith.constant dense<0.000000e+00> : vector<16xf32>
    %112 = vector.multi_reduction <add>, %111, %cst_28 [0, 2] : vector<4x16x24xf32> to vector<16xf32>
    %113 = vector.shape_cast %112 : vector<16xf32> to vector<1x16x1xf32>
    %cst_29 = arith.constant 3.125000e-02 : f32
    %114 = vector.broadcast %cst_29 : f32 to vector<1x16x1xf32>
    %115 = arith.mulf %107, %114 : vector<1x16x1xf32>
    %116 = arith.subf %99, %107 : vector<1x16x1xf32>
    %cst_30 = arith.constant 1.562500e-02 : f32
    %117 = vector.broadcast %cst_30 : f32 to vector<1x16x1xf32>
    %118 = arith.mulf %116, %117 : vector<1x16x1xf32>
    %cst_31 = arith.constant 3.125000e-02 : f32
    %119 = vector.broadcast %cst_31 : f32 to vector<1x16x1xf32>
    %120 = arith.mulf %113, %119 : vector<1x16x1xf32>
    %121 = arith.mulf %115, %115 : vector<1x16x1xf32>
    %122 = arith.subf %120, %121 : vector<1x16x1xf32>
    %cst_32 = arith.constant 0.000000e+00 : f32
    %123 = vector.broadcast %cst_32 : f32 to vector<1x16x1xf32>
    %124 = arith.maximumf %122, %123 : vector<1x16x1xf32>
    %125 = arith.subf %101, %113 : vector<1x16x1xf32>
    %cst_33 = arith.constant 1.562500e-02 : f32
    %126 = vector.broadcast %cst_33 : f32 to vector<1x16x1xf32>
    %127 = arith.mulf %125, %126 : vector<1x16x1xf32>
    %128 = arith.mulf %118, %118 : vector<1x16x1xf32>
    %129 = arith.subf %127, %128 : vector<1x16x1xf32>
    %cst_34 = arith.constant 0.000000e+00 : f32
    %130 = vector.broadcast %cst_34 : f32 to vector<1x16x1xf32>
    %131 = arith.maximumf %129, %130 : vector<1x16x1xf32>
    %132 = vector.shape_cast %96 : vector<1x1x24xi1> to vector<1x1x24xi1>
    %133 = vector.broadcast %132 : vector<1x1x24xi1> to vector<1x16x24xi1>
    %134 = vector.shape_cast %115 : vector<1x16x1xf32> to vector<1x16x1xf32>
    %135 = vector.broadcast %134 : vector<1x16x1xf32> to vector<1x16x24xf32>
    %136 = vector.shape_cast %118 : vector<1x16x1xf32> to vector<1x16x1xf32>
    %137 = vector.broadcast %136 : vector<1x16x1xf32> to vector<1x16x24xf32>
    %138 = arith.select %133, %135, %137 : vector<1x16x24xi1>, vector<1x16x24xf32>
    %139 = vector.shape_cast %96 : vector<1x1x24xi1> to vector<1x1x24xi1>
    %140 = vector.broadcast %139 : vector<1x1x24xi1> to vector<1x16x24xi1>
    %141 = vector.shape_cast %124 : vector<1x16x1xf32> to vector<1x16x1xf32>
    %142 = vector.broadcast %141 : vector<1x16x1xf32> to vector<1x16x24xf32>
    %143 = vector.shape_cast %131 : vector<1x16x1xf32> to vector<1x16x1xf32>
    %144 = vector.broadcast %143 : vector<1x16x1xf32> to vector<1x16x24xf32>
    %145 = arith.select %140, %142, %144 : vector<1x16x24xi1>, vector<1x16x24xf32>
    %146 = vector.broadcast %138 : vector<1x16x24xf32> to vector<4x16x24xf32>
    %147 = arith.subf %93, %146 : vector<4x16x24xf32>
    %cst_35 = arith.constant 9.99999974E-6 : f32
    %148 = vector.broadcast %cst_35 : f32 to vector<1x16x24xf32>
    %149 = arith.addf %145, %148 : vector<1x16x24xf32>
    %150 = math.rsqrt %149 : vector<1x16x24xf32>
    %151 = vector.broadcast %150 : vector<1x16x24xf32> to vector<4x16x24xf32>
    %152 = arith.mulf %147, %151 : vector<4x16x24xf32>
    %cst_36 = arith.constant 0.000000e+00 : f32
    %153 = vector.broadcast %cst_36 : f32 to vector<4x16x24xf32>
    %154 = arith.cmpf oge, %152, %153 : vector<4x16x24xf32>
    %cst_37 = arith.constant 0.00999999977 : f32
    %155 = vector.broadcast %cst_37 : f32 to vector<4x16x24xf32>
    %156 = arith.mulf %155, %152 : vector<4x16x24xf32>
    %157 = arith.select %154, %152, %156 : vector<4x16x24xi1>, vector<4x16x24xf32>
    %c64 = arith.constant 64 : index
    %c0_38 = arith.constant 0 : index
    %158 = vector.load %arg1[%c64, %c0_38] : memref<88x64xf32, #tpu.memory_space<vmem>>, vector<24x64xf32>
    %159 = vector.shape_cast %157 : vector<4x16x24xf32> to vector<64x24xf32>
    %cst_39 = arith.constant dense<0.000000e+00> : vector<64x64xf32>
    %160 = tpu.matmul %159, %158, %cst_39 {dimension_numbers = #tpu.dot_dimension_numbers<[1], [0], [0], [1], [0, 0, 1, 1], [], []>} : vector<64x24xf32>, vector<24x64xf32>, vector<64x64xf32> -> vector<64x64xf32>
    %161 = vector.shape_cast %160 : vector<64x64xf32> to vector<4x16x64xf32>
    %162 = tpu.iota {dimensions = array<i32: 2>} : vector<1x1x64xi32>
    %c32_i32 = arith.constant 32 : i32
    %163 = vector.broadcast %c32_i32 : i32 to vector<1x1x64xi32>
    %164 = arith.cmpi slt, %162, %163 : vector<1x1x64xi32>
    %165 = arith.mulf %161, %161 : vector<4x16x64xf32>
    %cst_40 = arith.constant dense<0.000000e+00> : vector<16xf32>
    %166 = vector.multi_reduction <add>, %161, %cst_40 [0, 2] : vector<4x16x64xf32> to vector<16xf32>
    %167 = vector.shape_cast %166 : vector<16xf32> to vector<1x16x1xf32>
    %cst_41 = arith.constant dense<0.000000e+00> : vector<16xf32>
    %168 = vector.multi_reduction <add>, %165, %cst_41 [0, 2] : vector<4x16x64xf32> to vector<16xf32>
    %169 = vector.shape_cast %168 : vector<16xf32> to vector<1x16x1xf32>
    %cst_42 = arith.constant 0.000000e+00 : f32
    %170 = vector.shape_cast %164 : vector<1x1x64xi1> to vector<1x1x64xi1>
    %171 = vector.broadcast %170 : vector<1x1x64xi1> to vector<4x16x64xi1>
    %172 = vector.broadcast %cst_42 : f32 to vector<4x16x64xf32>
    %173 = arith.select %171, %161, %172 : vector<4x16x64xi1>, vector<4x16x64xf32>
    %cst_43 = arith.constant dense<0.000000e+00> : vector<16xf32>
    %174 = vector.multi_reduction <add>, %173, %cst_43 [0, 2] : vector<4x16x64xf32> to vector<16xf32>
    %175 = vector.shape_cast %174 : vector<16xf32> to vector<1x16x1xf32>
    %cst_44 = arith.constant 0.000000e+00 : f32
    %176 = vector.shape_cast %164 : vector<1x1x64xi1> to vector<1x1x64xi1>
    %177 = vector.broadcast %176 : vector<1x1x64xi1> to vector<4x16x64xi1>
    %178 = vector.broadcast %cst_44 : f32 to vector<4x16x64xf32>
    %179 = arith.select %177, %165, %178 : vector<4x16x64xi1>, vector<4x16x64xf32>
    %cst_45 = arith.constant dense<0.000000e+00> : vector<16xf32>
    %180 = vector.multi_reduction <add>, %179, %cst_45 [0, 2] : vector<4x16x64xf32> to vector<16xf32>
    %181 = vector.shape_cast %180 : vector<16xf32> to vector<1x16x1xf32>
    %cst_46 = arith.constant 7.812500e-03 : f32
    %182 = vector.broadcast %cst_46 : f32 to vector<1x16x1xf32>
    %183 = arith.mulf %175, %182 : vector<1x16x1xf32>
    %184 = arith.subf %167, %175 : vector<1x16x1xf32>
    %cst_47 = arith.constant 7.812500e-03 : f32
    %185 = vector.broadcast %cst_47 : f32 to vector<1x16x1xf32>
    %186 = arith.mulf %184, %185 : vector<1x16x1xf32>
    %cst_48 = arith.constant 7.812500e-03 : f32
    %187 = vector.broadcast %cst_48 : f32 to vector<1x16x1xf32>
    %188 = arith.mulf %181, %187 : vector<1x16x1xf32>
    %189 = arith.mulf %183, %183 : vector<1x16x1xf32>
    %190 = arith.subf %188, %189 : vector<1x16x1xf32>
    %cst_49 = arith.constant 0.000000e+00 : f32
    %191 = vector.broadcast %cst_49 : f32 to vector<1x16x1xf32>
    %192 = arith.maximumf %190, %191 : vector<1x16x1xf32>
    %193 = arith.subf %169, %181 : vector<1x16x1xf32>
    %cst_50 = arith.constant 7.812500e-03 : f32
    %194 = vector.broadcast %cst_50 : f32 to vector<1x16x1xf32>
    %195 = arith.mulf %193, %194 : vector<1x16x1xf32>
    %196 = arith.mulf %186, %186 : vector<1x16x1xf32>
    %197 = arith.subf %195, %196 : vector<1x16x1xf32>
    %cst_51 = arith.constant 0.000000e+00 : f32
    %198 = vector.broadcast %cst_51 : f32 to vector<1x16x1xf32>
    %199 = arith.maximumf %197, %198 : vector<1x16x1xf32>
    %200 = vector.shape_cast %164 : vector<1x1x64xi1> to vector<1x1x64xi1>
    %201 = vector.broadcast %200 : vector<1x1x64xi1> to vector<1x16x64xi1>
    %202 = vector.shape_cast %183 : vector<1x16x1xf32> to vector<1x16x1xf32>
    %203 = vector.broadcast %202 : vector<1x16x1xf32> to vector<1x16x64xf32>
    %204 = vector.shape_cast %186 : vector<1x16x1xf32> to vector<1x16x1xf32>
    %205 = vector.broadcast %204 : vector<1x16x1xf32> to vector<1x16x64xf32>
    %206 = arith.select %201, %203, %205 : vector<1x16x64xi1>, vector<1x16x64xf32>
    %207 = vector.shape_cast %164 : vector<1x1x64xi1> to vector<1x1x64xi1>
    %208 = vector.broadcast %207 : vector<1x1x64xi1> to vector<1x16x64xi1>
    %209 = vector.shape_cast %192 : vector<1x16x1xf32> to vector<1x16x1xf32>
    %210 = vector.broadcast %209 : vector<1x16x1xf32> to vector<1x16x64xf32>
    %211 = vector.shape_cast %199 : vector<1x16x1xf32> to vector<1x16x1xf32>
    %212 = vector.broadcast %211 : vector<1x16x1xf32> to vector<1x16x64xf32>
    %213 = arith.select %208, %210, %212 : vector<1x16x64xi1>, vector<1x16x64xf32>
    %214 = vector.broadcast %206 : vector<1x16x64xf32> to vector<4x16x64xf32>
    %215 = arith.subf %161, %214 : vector<4x16x64xf32>
    %cst_52 = arith.constant 9.99999974E-6 : f32
    %216 = vector.broadcast %cst_52 : f32 to vector<1x16x64xf32>
    %217 = arith.addf %213, %216 : vector<1x16x64xf32>
    %218 = math.rsqrt %217 : vector<1x16x64xf32>
    %219 = vector.broadcast %218 : vector<1x16x64xf32> to vector<4x16x64xf32>
    %220 = arith.mulf %215, %219 : vector<4x16x64xf32>
    %cst_53 = arith.constant 0.000000e+00 : f32
    %221 = vector.broadcast %cst_53 : f32 to vector<4x16x64xf32>
    %222 = arith.cmpf oge, %220, %221 : vector<4x16x64xf32>
    %cst_54 = arith.constant 0.00999999977 : f32
    %223 = vector.broadcast %cst_54 : f32 to vector<4x16x64xf32>
    %224 = arith.mulf %223, %220 : vector<4x16x64xf32>
    %225 = arith.select %222, %220, %224 : vector<4x16x64xi1>, vector<4x16x64xf32>
    %226 = arith.mulf %225, %225 : vector<4x16x64xf32>
    %cst_55 = arith.constant dense<0.000000e+00> : vector<4x64xf32>
    %227 = vector.multi_reduction <add>, %226, %cst_55 [1] : vector<4x16x64xf32> to vector<4x64xf32>
    %228 = vector.shape_cast %227 : vector<4x64xf32> to vector<4x1x64xf32>
    %cst_56 = arith.constant 1.000000e-24 : f32
    %229 = vector.broadcast %cst_56 : f32 to vector<4x1x64xf32>
    %230 = arith.maximumf %228, %229 : vector<4x1x64xf32>
    %231 = math.rsqrt %230 : vector<4x1x64xf32>
    %232 = vector.broadcast %231 : vector<4x1x64xf32> to vector<4x16x64xf32>
    %233 = arith.mulf %225, %232 : vector<4x16x64xf32>
    %234 = vector.extract_strided_slice %233 {offsets = [0, 0, 0], sizes = [4, 16, 32], strides = [1, 1, 1]} : vector<4x16x64xf32> to vector<4x16x32xf32>
    %235 = vector.extract_strided_slice %233 {offsets = [0, 0, 32], sizes = [4, 16, 32], strides = [1, 1, 1]} : vector<4x16x64xf32> to vector<4x16x32xf32>
    %cst_57 = arith.constant dense<0.000000e+00> : vector<4x16x16xf32>
    %236 = tpu.matmul %234, %235, %cst_57 {dimension_numbers = #tpu.dot_dimension_numbers<[2], [2], [1], [1], [0, 0, 0, 1, 1, 1], [0], [0]>} : vector<4x16x32xf32>, vector<4x16x32xf32>, vector<4x16x16xf32> -> vector<4x16x16xf32>
    %cst_58 = arith.constant 1.000000e+02 : f32
    %237 = vector.broadcast %cst_58 : f32 to vector<4x16x16xf32>
    %238 = arith.mulf %236, %237 : vector<4x16x16xf32>
    %239 = tpu.iota {dimensions = array<i32: 1>} : vector<1x16x16xi32>
    %240 = tpu.iota {dimensions = array<i32: 2>} : vector<1x16x16xi32>
    %241 = arith.addi %239, %240 : vector<1x16x16xi32>
    %c15_i32_59 = arith.constant 15 : i32
    %242 = vector.broadcast %c15_i32_59 : i32 to vector<1x16x16xi32>
    %243 = arith.cmpi eq, %241, %242 : vector<1x16x16xi32>
    %cst_60 = arith.constant 0.000000e+00 : f32
    %244 = vector.shape_cast %243 : vector<1x16x16xi1> to vector<1x16x16xi1>
    %245 = vector.broadcast %244 : vector<1x16x16xi1> to vector<4x16x16xi1>
    %246 = vector.broadcast %cst_60 : f32 to vector<4x16x16xf32>
    %247 = arith.select %245, %238, %246 : vector<4x16x16xi1>, vector<4x16x16xf32>
    %cst_61 = arith.constant dense<0.000000e+00> : vector<4x16xf32>
    %248 = vector.multi_reduction <add>, %247, %cst_61 [1] : vector<4x16x16xf32> to vector<4x16xf32>
    %249 = vector.shape_cast %248 : vector<4x16xf32> to vector<4x1x16xf32>
    %c0_i32_62 = arith.constant 0 : i32
    %250 = vector.broadcast %c0_i32_62 : i32 to vector<1x16x16xi32>
    %251 = arith.cmpi eq, %239, %250 : vector<1x16x16xi32>
    %cst_63 = arith.constant 0xFF800000 : f32
    %252 = vector.shape_cast %243 : vector<1x16x16xi1> to vector<1x16x16xi1>
    %253 = vector.broadcast %252 : vector<1x16x16xi1> to vector<4x16x16xi1>
    %254 = vector.broadcast %cst_63 : f32 to vector<4x16x16xf32>
    %255 = arith.select %253, %254, %238 : vector<4x16x16xi1>, vector<4x16x16xf32>
    %256 = vector.shape_cast %251 : vector<1x16x16xi1> to vector<1x16x16xi1>
    %257 = vector.broadcast %256 : vector<1x16x16xi1> to vector<4x16x16xi1>
    %258 = vector.shape_cast %249 : vector<4x1x16xf32> to vector<4x1x16xf32>
    %259 = vector.broadcast %258 : vector<4x1x16xf32> to vector<4x16x16xf32>
    %260 = arith.select %257, %259, %255 : vector<4x16x16xi1>, vector<4x16x16xf32>
    %261 = vector.extract_strided_slice %260 {offsets = [0, 0, 0], sizes = [4, 16, 15], strides = [1, 1, 1]} : vector<4x16x16xf32> to vector<4x16x15xf32>
    %c0_64 = arith.constant 0 : index
    %c0_65 = arith.constant 0 : index
    %c0_66 = arith.constant 0 : index
    %262 = vector.load %arg2[%c0_64, %c0_65, %c0_66] : memref<4x16x15xf32, #tpu.memory_space<vmem>>, vector<4x16x15xf32>
    tpu.vector_store %arg2[%c0_64, %c0_65, %c0_66], %261 {strides = array<i32>} : memref<4x16x15xf32, #tpu.memory_space<vmem>>, vector<4x16x15xf32>,
    return
  }
}

</mosaic_0001>

<llo_original>
// kernel: icl_forward.1
$region0: #{icl_forward.1}
  #allocation0 [shape = 'u32[]', space=smem, size = 0x4, offset = 0x4, fixed_abs, tag = 'smem constant byte address 0x4 - core index']
  #allocation1 [shape = 'u32[144,128]{1,0:T(1,128)}', space=vmem, size = 0x12000, scoped, tag = 'internal scratch']
  %s0 = inlined_call_operand.vmem [shape: f32[4,16,16], index: 0, kind: input, shape index: {}]
  %s1 = inlined_call_operand.vmem [shape: f32[88,64], index: 1, kind: input, shape index: {}]
  %s2 = inlined_call_operand.vmem [shape: f32[4,16,15], index: 2, kind: output, shape index: {}]
  %s3 = sld [smem:[#allocation0]]
  $region18: #{icl_forward.1} parent=0
    _
  %s5 = ssub.s32 1, %s3
  %s6 = scalar_select 0, %s5, %s3
  // Predicated region
  $region2: #{icl_forward.1} parent=0 // pred_check
    _
  $region3: #{icl_forward.1} parent=0 // pred_check_branch
    %8 = sbr.rel (0) target = $region5
  $region4: #{icl_forward.1} parent=0 // pred_region
    _
  $region5: #{icl_forward.1} parent=0 // pred_fallthru
    _
  // Predicated region
  $region6: #{icl_forward.1} parent=0 // pred_check
    _
  $region7: #{icl_forward.1} parent=0 // pred_check_branch
    %10 = sbr.rel (0) target = $region9
  $region8: #{icl_forward.1} parent=0 // pred_region
    _
  $region9: #{icl_forward.1} parent=0 // pred_fallthru
    _
  %v11 = vld [vmem:[%s0] sm:$0xff]
  %v12 = vld [vmem:[%s0 + $0x8] sm:$0xff]
  %v13 = vld [vmem:[%s0 + $0x10] sm:$0xff]
  %v14 = vld [vmem:[%s0 + $0x18] sm:$0xff]
  %v15 = vld [vmem:[%s0 + $0x20] sm:$0xff]
  %v16 = vld [vmem:[%s0 + $0x28] sm:$0xff]
  %v17 = vld [vmem:[%s0 + $0x30] sm:$0xff]
  %v18 = vld [vmem:[%s0 + $0x38] sm:$0xff]
  %v19 = vlaneseq
  %v20 = vshrl.u32 %v19, 7
  %v21 = vadd.s32 %v20, 8
  %v22 = vlaneseq
  %v23 = vand.u32 %v22, 127
  %vm24 = vcmp.eq.s32.totalorder %v20, 0
  %vm25 = vcmp.eq.s32.totalorder %v21, 0
  %vm26 = vcmp.lt.s32.totalorder %v23, 2
  %vm27 = vmand %vm24, %vm26
  %vm28 = vmand %vm25, %vm26
  %vm29 = vcmp.eq.s32.totalorder %v20, 15
  %vm30 = vcmp.eq.s32.totalorder %v21, 15
  %vm31 = vcmp.ge.s32.totalorder %v23, 2
  %vm32 = vmand %vm29, %vm31
  %vm33 = vmand %vm30, %vm31
  %vm34 = vmor %vm27, %vm32
  %vm35 = vmor %vm28, %vm33
  %v36 = vsel %vm34, 1, 0
  %v37 = vsel %vm35, 1, 0
  %vm38 = vcmp.eq.s32.totalorder %v36, 1
  %vm39 = vcmp.eq.s32.totalorder %v37, 1
  %v40 = vsel %vm38, 0.0, %v11
  %v41 = vsel %vm39, 0.0, %v12
  %v42 = vsel %vm38, 0.0, %v13
  %v43 = vsel %vm39, 0.0, %v14
  %v44 = vsel %vm38, 0.0, %v15
  %v45 = vsel %vm39, 0.0, %v16
  %v46 = vsel %vm38, 0.0, %v17
  %v47 = vsel %vm39, 0.0, %v18
  %v48 = vld [vmem:[%s1] sm:$0xff]
  %v49 = vld [vmem:[%s1 + $0x8] sm:$0xff]
  %vm50 = vcmask 130048
  %v52 = vsel %vm50, %v40, 0
  %v55 = vsel %vm50, %v41, 0
  %v58 = vsel %vm50, %v42, 0
  %v61 = vsel %vm50, %v43, 0
  %v64 = vsel %vm50, %v44, 0
  %v67 = vsel %vm50, %v45, 0
  %v70 = vsel %vm50, %v46, 0
  %v73 = vsel %vm50, %v47, 0
  %75 = vmatprep.subr.mxu0 0.0
  %76 = vmatpush1.msra.mxu0 0.0
  %77 = vmatprep.subr.mxu0 0.0
  %78 = vmatpush1.msra.mxu0 0.0
  %79 = vmatprep.subr.mxu0 0.0
  %80 = vmatpush1.msra.mxu0 0.0
  %81 = vmatprep.subr.mxu0 0.0
  %82 = vmatpush1.msra.mxu0 0.0
  %83 = vmatprep.subr.mxu0 0.0
  %84 = vmatpush1.msra.mxu0 0.0
  %85 = vmatprep.subr.mxu0 0.0
  %86 = vmatpush1.msra.mxu0 0.0
  %87 = vmatprep.subr.mxu0 0.0
  %88 = vmatpush1.msra.mxu0 0.0
  %89 = vmatprep.subr.mxu0 0.0
  %90 = vmatpush1.msra.mxu0 0.0
  %91 = vmatprep.subr.mxu0 0.0
  %92 = vmatpush1.msra.mxu0 0.0
  %93 = vmatprep.subr.mxu0 0.0
  %94 = vmatpush1.msra.mxu0 0.0
  %95 = vmatprep.subr.mxu0 0.0
  %96 = vmatpush1.msra.mxu0 0.0
  %97 = vmatprep.subr.mxu0 0.0
  %98 = vmatpush1.msra.mxu0 0.0
  %99 = vmatprep.subr.mxu0 0.0
  %100 = vmatpush1.msra.mxu0 0.0
  %101 = vmatprep.subr.mxu0 0.0
  %102 = vmatpush1.msra.mxu0 0.0
  %103 = vmatprep.subr.mxu0 0.0
  %104 = vmatpush1.msra.mxu0 %v49
  %105 = vmatprep.subr.mxu0 0.0
  %106 = vmatpush1.msra.mxu0 %v48
  %107 = vmatprep.subr.mxu0 0.0
  %108 = vmatpush2.msra.mxu0 0.0
  %109 = vmatprep.subr.mxu0 0.0
  %110 = vmatpush2.msra.mxu0 0.0
  %111 = vmatprep.subr.mxu0 0.0
  %112 = vmatpush2.msra.mxu0 0.0
  %113 = vmatprep.subr.mxu0 0.0
  %114 = vmatpush2.msra.mxu0 0.0
  %115 = vmatprep.subr.mxu0 0.0
  %116 = vmatpush2.msra.mxu0 0.0
  %117 = vmatprep.subr.mxu0 0.0
  %118 = vmatpush2.msra.mxu0 0.0
  %119 = vmatprep.subr.mxu0 0.0
  %120 = vmatpush2.msra.mxu0 0.0
  %121 = vmatprep.subr.mxu0 0.0
  %122 = vmatpush2.msra.mxu0 0.0
  %123 = vmatprep.subr.mxu0 0.0
  %124 = vmatpush2.msra.mxu0 0.0
  %125 = vmatprep.subr.mxu0 0.0
  %126 = vmatpush2.msra.mxu0 0.0
  %127 = vmatprep.subr.mxu0 0.0
  %128 = vmatpush2.msra.mxu0 0.0
  %129 = vmatprep.subr.mxu0 0.0
  %130 = vmatpush2.msra.mxu0 0.0
  %131 = vmatprep.subr.mxu0 0.0
  %132 = vmatpush2.msra.mxu0 0.0
  %133 = vmatprep.subr.mxu0 0.0
  %134 = vmatpush2.msra.mxu0 0.0
  %135 = vmatprep.subr.mxu0 0.0
  %136 = vmatpush2.msra.mxu0 0.0
  %137 = vmatprep.subr.mxu0 0.0
  %138 = vmatpush2.msra.mxu0 0.0
  %139 = vmatprep.mubr.f32.mxu0 0.0
  %140 = vmatmul.mubr.f32.gmra.mxu0 %v52
  %v141 = vpop.f32.mrf.mxu0
  %v142 = vadd.f32 0.0, %v141
  %v143 = vpop.f32.mrf.mxu0
  %144 = vmatprep.mubr.f32.mxu0 0.0
  %145 = vmatmul.mubr.f32.gmra.mxu0 %v55
  %v146 = vpop.f32.mrf.mxu0
  %v147 = vadd.f32 0.0, %v146
  %v148 = vpop.f32.mrf.mxu0
  %149 = vmatprep.mubr.f32.mxu0 0.0
  %150 = vmatmul.mubr.f32.gmra.mxu0 %v58
  %v151 = vpop.f32.mrf.mxu0
  %v152 = vadd.f32 0.0, %v151
  %v153 = vpop.f32.mrf.mxu0
  %154 = vmatprep.mubr.f32.mxu0 0.0
  %155 = vmatmul.mubr.f32.gmra.mxu0 %v61
  %v156 = vpop.f32.mrf.mxu0
  %v157 = vadd.f32 0.0, %v156
  %v158 = vpop.f32.mrf.mxu0
  %159 = vmatprep.mubr.f32.mxu0 0.0
  %160 = vmatmul.mubr.f32.gmra.mxu0 %v64
  %v161 = vpop.f32.mrf.mxu0
  %v162 = vadd.f32 0.0, %v161
  %v163 = vpop.f32.mrf.mxu0
  %164 = vmatprep.mubr.f32.mxu0 0.0
  %165 = vmatmul.mubr.f32.gmra.mxu0 %v67
  %v166 = vpop.f32.mrf.mxu0
  %v167 = vadd.f32 0.0, %v166
  %v168 = vpop.f32.mrf.mxu0
  %169 = vmatprep.mubr.f32.mxu0 0.0
  %170 = vmatmul.mubr.f32.gmra.mxu0 %v70
  %v171 = vpop.f32.mrf.mxu0
  %v172 = vadd.f32 0.0, %v171
  %v173 = vpop.f32.mrf.mxu0
  %174 = vmatprep.mubr.f32.mxu0 0.0
  %175 = vmatmul.mubr.f32.gmra.mxu0 %v73
  %v176 = vpop.f32.mrf.mxu0
  %v177 = vadd.f32 0.0, %v176
  %v178 = vpop.f32.mrf.mxu0
  %179 = vdwg.mxu0
  %vm180 = vcmp.lt.s32.totalorder %v23, 16
  %v181 = vmul.f32 %v142, %v142
  %v182 = vmul.f32 %v147, %v147
  %v183 = vmul.f32 %v152, %v152
  %v184 = vmul.f32 %v157, %v157
  %v185 = vmul.f32 %v162, %v162
  %v186 = vmul.f32 %v167, %v167
  %v187 = vmul.f32 %v172, %v172
  %v188 = vmul.f32 %v177, %v177
  %vm189 = vcmask 392192
  %v190 = vsel %vm189, %v142, 0.0
  %v191 = vsel %vm189, %v152, 0.0
  %v192 = vadd.f32 %v190, %v191
  %v193 = vsel %vm189, %v162, 0.0
  %v194 = vadd.f32 %v192, %v193
  %v195 = vsel %vm189, %v172, 0.0
  %v196 = vadd.f32 %v194, %v195
  %197 = vadd.xlane.f32.xlu0 %v196
  %v198 = vpop.xlane.xlu0 %197
  %v199 = vsel %vm189, %v147, 0.0
  %v200 = vsel %vm189, %v157, 0.0
  %v201 = vadd.f32 %v199, %v200
  %v202 = vsel %vm189, %v167, 0.0
  %v203 = vadd.f32 %v201, %v202
  %v204 = vsel %vm189, %v177, 0.0
  %v205 = vadd.f32 %v203, %v204
  %206 = vadd.xlane.f32.xlu0 %v205
  %v207 = vpop.xlane.xlu0 %206
  %v208 = vsel %vm189, %v181, 0.0
  %v209 = vsel %vm189, %v183, 0.0
  %v210 = vadd.f32 %v208, %v209
  %v211 = vsel %vm189, %v185, 0.0
  %v212 = vadd.f32 %v210, %v211
  %v213 = vsel %vm189, %v187, 0.0
  %v214 = vadd.f32 %v212, %v213
  %215 = vadd.xlane.f32.xlu0 %v214
  %v216 = vpop.xlane.xlu0 %215
  %v217 = vsel %vm189, %v182, 0.0
  %v218 = vsel %vm189, %v184, 0.0
  %v219 = vadd.f32 %v217, %v218
  %v220 = vsel %vm189, %v186, 0.0
  %v221 = vadd.f32 %v219, %v220
  %v222 = vsel %vm189, %v188, 0.0
  %v223 = vadd.f32 %v221, %v222
  %224 = vadd.xlane.f32.xlu0 %v223
  %v225 = vpop.xlane.xlu0 %224
  %v226 = vsel %vm180, 1, 0
  %vm227 = vcmp.eq.s32.totalorder %v226, 1
  %v228 = vsel %vm227, %v142, 0.0
  %v229 = vsel %vm227, %v147, 0.0
  %v230 = vsel %vm227, %v152, 0.0
  %v231 = vsel %vm227, %v157, 0.0
  %v232 = vsel %vm227, %v162, 0.0
  %v233 = vsel %vm227, %v167, 0.0
  %v234 = vsel %vm227, %v172, 0.0
  %v235 = vsel %vm227, %v177, 0.0
  %v236 = vsel %vm189, %v228, 0.0
  %v237 = vsel %vm189, %v230, 0.0
  %v238 = vadd.f32 %v236, %v237
  %v239 = vsel %vm189, %v232, 0.0
  %v240 = vadd.f32 %v238, %v239
  %v241 = vsel %vm189, %v234, 0.0
  %v242 = vadd.f32 %v240, %v241
  %243 = vadd.xlane.f32.xlu0 %v242
  %v244 = vpop.xlane.xlu0 %243
  %v245 = vsel %vm189, %v229, 0.0
  %v246 = vsel %vm189, %v231, 0.0
  %v247 = vadd.f32 %v245, %v246
  %v248 = vsel %vm189, %v233, 0.0
  %v249 = vadd.f32 %v247, %v248
  %v250 = vsel %vm189, %v235, 0.0
  %v251 = vadd.f32 %v249, %v250
  %252 = vadd.xlane.f32.xlu0 %v251
  %v253 = vpop.xlane.xlu0 %252
  %v254 = vsel %vm227, %v181, 0.0
  %v255 = vsel %vm227, %v182, 0.0
  %v256 = vsel %vm227, %v183, 0.0
  %v257 = vsel %vm227, %v184, 0.0
  %v258 = vsel %vm227, %v185, 0.0
  %v259 = vsel %vm227, %v186, 0.0
  %v260 = vsel %vm227, %v187, 0.0
  %v261 = vsel %vm227, %v188, 0.0
  %v262 = vsel %vm189, %v254, 0.0
  %v263 = vsel %vm189, %v256, 0.0
  %v264 = vadd.f32 %v262, %v263
  %v265 = vsel %vm189, %v258, 0.0
  %v266 = vadd.f32 %v264, %v265
  %v267 = vsel %vm189, %v260, 0.0
  %v268 = vadd.f32 %v266, %v267
  %269 = vadd.xlane.f32.xlu0 %v268
  %v270 = vpop.xlane.xlu0 %269
  %v271 = vsel %vm189, %v255, 0.0
  %v272 = vsel %vm189, %v257, 0.0
  %v273 = vadd.f32 %v271, %v272
  %v274 = vsel %vm189, %v259, 0.0
  %v275 = vadd.f32 %v273, %v274
  %v276 = vsel %vm189, %v261, 0.0
  %v277 = vadd.f32 %v275, %v276
  %278 = vadd.xlane.f32.xlu0 %v277
  %v279 = vpop.xlane.xlu0 %278
  %v280 = vmul.f32 %v244, 0.015625
  %v281 = vmul.f32 %v253, 0.015625
  %v282 = vsub.f32 %v198, %v244
  %v283 = vsub.f32 %v207, %v253
  %v284 = vmul.f32 %v282, 0.0078125
  %v285 = vmul.f32 %v283, 0.0078125
  %v286 = vmul.f32 %v270, 0.015625
  %v287 = vmul.f32 %v279, 0.015625
  %v288 = vmul.f32 %v280, %v280
  %v289 = vmul.f32 %v281, %v281
  %v290 = vsub.f32 %v286, %v288
  %v291 = vsub.f32 %v287, %v289
  %v292 = vmax.f32 %v290, 0.0
  %v293 = vmax.f32 %v291, 0.0
  %v294 = vsub.f32 %v216, %v270
  %v295 = vsub.f32 %v225, %v279
  %v296 = vmul.f32 %v294, 0.0078125
  %v297 = vmul.f32 %v295, 0.0078125
  %v298 = vmul.f32 %v284, %v284
  %v299 = vmul.f32 %v285, %v285
  %v300 = vsub.f32 %v296, %v298
  %v301 = vsub.f32 %v297, %v299
  %v302 = vmax.f32 %v300, 0.0
  %v303 = vmax.f32 %v301, 0.0
  %v304 = vsel %vm227, %v280, %v284
  %v305 = vsel %vm227, %v281, %v285
  %v306 = vsel %vm227, %v292, %v302
  %v307 = vsel %vm227, %v293, %v303
  %v308 = vsub.f32 %v142, %v304
  %v309 = vsub.f32 %v147, %v305
  %v310 = vsub.f32 %v152, %v304
  %v311 = vsub.f32 %v157, %v305
  %v312 = vsub.f32 %v162, %v304
  %v313 = vsub.f32 %v167, %v305
  %v314 = vsub.f32 %v172, %v304
  %v315 = vsub.f32 %v177, %v305
  %v316 = vadd.f32 %v306, 1e-05
  %v317 = vadd.f32 %v307, 1e-05
  %v318 = vrsqrt.pop %v316
  %v319 = vrsqrt.pop %v317
  %v320 = vmul.f32 %v308, %v318
  %v321 = vmul.f32 %v309, %v319
  %v322 = vmul.f32 %v310, %v318
  %v323 = vmul.f32 %v311, %v319
  %v324 = vmul.f32 %v312, %v318
  %v325 = vmul.f32 %v313, %v319
  %v326 = vmul.f32 %v314, %v318
  %v327 = vmul.f32 %v315, %v319
  %vm328 = vcmp.ge.f32.partialorder %v320, 0.0
  %vm329 = vcmp.ge.f32.partialorder %v321, 0.0
  %vm330 = vcmp.ge.f32.partialorder %v322, 0.0
  %vm331 = vcmp.ge.f32.partialorder %v323, 0.0
  %vm332 = vcmp.ge.f32.partialorder %v324, 0.0
  %vm333 = vcmp.ge.f32.partialorder %v325, 0.0
  %vm334 = vcmp.ge.f32.partialorder %v326, 0.0
  %vm335 = vcmp.ge.f32.partialorder %v327, 0.0
  %v336 = vmul.f32 %v320, 0.01
  %v337 = vmul.f32 %v321, 0.01
  %v338 = vmul.f32 %v322, 0.01
  %v339 = vmul.f32 %v323, 0.01
  %v340 = vmul.f32 %v324, 0.01
  %v341 = vmul.f32 %v325, 0.01
  %v342 = vmul.f32 %v326, 0.01
  %v343 = vmul.f32 %v327, 0.01
  %v344 = vsel %vm328, %v320, %v336
  %v345 = vsel %vm329, %v321, %v337
  %v346 = vsel %vm330, %v322, %v338
  %v347 = vsel %vm331, %v323, %v339
  %v348 = vsel %vm332, %v324, %v340
  %v349 = vsel %vm333, %v325, %v341
  %v350 = vsel %vm334, %v326, %v342
  %v351 = vsel %vm335, %v327, %v343
  %v352 = vtanh.pop %v320
  %v353 = vtanh.pop %v321
  %v354 = vtanh.pop %v322
  %v355 = vtanh.pop %v323
  %v356 = vtanh.pop %v324
  %v357 = vtanh.pop %v325
  %v358 = vtanh.pop %v326
  %v359 = vtanh.pop %v327
  %v360 = vsel %vm227, %v344, %v352
  %v361 = vsel %vm227, %v345, %v353
  %v362 = vsel %vm227, %v346, %v354
  %v363 = vsel %vm227, %v347, %v355
  %v364 = vsel %vm227, %v348, %v356
  %v365 = vsel %vm227, %v349, %v357
  %v366 = vsel %vm227, %v350, %v358
  %v367 = vsel %vm227, %v351, %v359
  %v368 = vld [vmem:[%s1 + $0x10] sm:$0xff]
  %v369 = vld [vmem:[%s1 + $0x18] sm:$0xff]
  %v370 = vld [vmem:[%s1 + $0x20] sm:$0xff]
  %v371 = vld [vmem:[%s1 + $0x28] sm:$0xff]
  %v372 = vld [vmem:[%s1 + $0x30] sm:$0xff]
  %v373 = vld [vmem:[%s1 + $0x38] sm:$0xff]
  %v375 = vsel %vm189, %v360, 0
  %v378 = vsel %vm189, %v361, 0
  %v381 = vsel %vm189, %v362, 0
  %v384 = vsel %vm189, %v363, 0
  %v387 = vsel %vm189, %v364, 0
  %v390 = vsel %vm189, %v365, 0
  %v393 = vsel %vm189, %v366, 0
  %v396 = vsel %vm189, %v367, 0
  %398 = vmatprep.subr.mxu0 0.0
  %399 = vmatpush1.msra.mxu0 0.0
  %400 = vmatprep.subr.mxu0 0.0
  %401 = vmatpush1.msra.mxu0 0.0
  %402 = vmatprep.subr.mxu0 0.0
  %403 = vmatpush1.msra.mxu0 0.0
  %404 = vmatprep.subr.mxu0 0.0
  %405 = vmatpush1.msra.mxu0 0.0
  %406 = vmatprep.subr.mxu0 0.0
  %407 = vmatpush1.msra.mxu0 0.0
  %408 = vmatprep.subr.mxu0 0.0
  %409 = vmatpush1.msra.mxu0 0.0
  %410 = vmatprep.subr.mxu0 0.0
  %411 = vmatpush1.msra.mxu0 0.0
  %412 = vmatprep.subr.mxu0 0.0
  %413 = vmatpush1.msra.mxu0 0.0
  %414 = vmatprep.subr.mxu0 0.0
  %415 = vmatpush1.msra.mxu0 0.0
  %416 = vmatprep.subr.mxu0 0.0
  %417 = vmatpush1.msra.mxu0 0.0
  %418 = vmatprep.subr.mxu0 0.0
  %419 = vmatpush1.msra.mxu0 %v373
  %420 = vmatprep.subr.mxu0 0.0
  %421 = vmatpush1.msra.mxu0 %v372
  %422 = vmatprep.subr.mxu0 0.0
  %423 = vmatpush1.msra.mxu0 %v371
  %424 = vmatprep.subr.mxu0 0.0
  %425 = vmatpush1.msra.mxu0 %v370
  %426 = vmatprep.subr.mxu0 0.0
  %427 = vmatpush1.msra.mxu0 %v369
  %428 = vmatprep.subr.mxu0 0.0
  %429 = vmatpush1.msra.mxu0 %v368
  %430 = vmatprep.subr.mxu0 0.0
  %431 = vmatpush2.msra.mxu0 0.0
  %432 = vmatprep.subr.mxu0 0.0
  %433 = vmatpush2.msra.mxu0 0.0
  %434 = vmatprep.subr.mxu0 0.0
  %435 = vmatpush2.msra.mxu0 0.0
  %436 = vmatprep.subr.mxu0 0.0
  %437 = vmatpush2.msra.mxu0 0.0
  %438 = vmatprep.subr.mxu0 0.0
  %439 = vmatpush2.msra.mxu0 0.0
  %440 = vmatprep.subr.mxu0 0.0
  %441 = vmatpush2.msra.mxu0 0.0
  %442 = vmatprep.subr.mxu0 0.0
  %443 = vmatpush2.msra.mxu0 0.0
  %444 = vmatprep.subr.mxu0 0.0
  %445 = vmatpush2.msra.mxu0 0.0
  %446 = vmatprep.subr.mxu0 0.0
  %447 = vmatpush2.msra.mxu0 0.0
  %448 = vmatprep.subr.mxu0 0.0
  %449 = vmatpush2.msra.mxu0 0.0
  %450 = vmatprep.subr.mxu0 0.0
  %451 = vmatpush2.msra.mxu0 0.0
  %452 = vmatprep.subr.mxu0 0.0
  %453 = vmatpush2.msra.mxu0 0.0
  %454 = vmatprep.subr.mxu0 0.0
  %455 = vmatpush2.msra.mxu0 0.0
  %456 = vmatprep.subr.mxu0 0.0
  %457 = vmatpush2.msra.mxu0 0.0
  %458 = vmatprep.subr.mxu0 0.0
  %459 = vmatpush2.msra.mxu0 0.0
  %460 = vmatprep.subr.mxu0 0.0
  %461 = vmatpush2.msra.mxu0 0.0
  %462 = vmatprep.mubr.f32.mxu0 0.0
  %463 = vmatmul.mubr.f32.gmra.mxu0 %v375
  %v464 = vpop.f32.mrf.mxu0
  %v465 = vadd.f32 0.0, %v464
  %v466 = vpop.f32.mrf.mxu0
  %467 = vmatprep.mubr.f32.mxu0 0.0
  %468 = vmatmul.mubr.f32.gmra.mxu0 %v378
  %v469 = vpop.f32.mrf.mxu0
  %v470 = vadd.f32 0.0, %v469
  %v471 = vpop.f32.mrf.mxu0
  %472 = vmatprep.mubr.f32.mxu0 0.0
  %473 = vmatmul.mubr.f32.gmra.mxu0 %v381
  %v474 = vpop.f32.mrf.mxu0
  %v475 = vadd.f32 0.0, %v474
  %v476 = vpop.f32.mrf.mxu0
  %477 = vmatprep.mubr.f32.mxu0 0.0
  %478 = vmatmul.mubr.f32.gmra.mxu0 %v384
  %v479 = vpop.f32.mrf.mxu0
  %v480 = vadd.f32 0.0, %v479
  %v481 = vpop.f32.mrf.mxu0
  %482 = vmatprep.mubr.f32.mxu0 0.0
  %483 = vmatmul.mubr.f32.gmra.mxu0 %v387
  %v484 = vpop.f32.mrf.mxu0
  %v485 = vadd.f32 0.0, %v484
  %v486 = vpop.f32.mrf.mxu0
  %487 = vmatprep.mubr.f32.mxu0 0.0
  %488 = vmatmul.mubr.f32.gmra.mxu0 %v390
  %v489 = vpop.f32.mrf.mxu0
  %v490 = vadd.f32 0.0, %v489
  %v491 = vpop.f32.mrf.mxu0
  %492 = vmatprep.mubr.f32.mxu0 0.0
  %493 = vmatmul.mubr.f32.gmra.mxu0 %v393
  %v494 = vpop.f32.mrf.mxu0
  %v495 = vadd.f32 0.0, %v494
  %v496 = vpop.f32.mrf.mxu0
  %497 = vmatprep.mubr.f32.mxu0 0.0
  %498 = vmatmul.mubr.f32.gmra.mxu0 %v396
  %v499 = vpop.f32.mrf.mxu0
  %v500 = vadd.f32 0.0, %v499
  %v501 = vpop.f32.mrf.mxu0
  %502 = vdwg.mxu0
  %vm503 = vcmp.lt.s32.totalorder %v23, 8
  %v504 = vmul.f32 %v465, %v465
  %v505 = vmul.f32 %v470, %v470
  %v506 = vmul.f32 %v475, %v475
  %v507 = vmul.f32 %v480, %v480
  %v508 = vmul.f32 %v485, %v485
  %v509 = vmul.f32 %v490, %v490
  %v510 = vmul.f32 %v495, %v495
  %v511 = vmul.f32 %v500, %v500
  %vm512 = vcmask 195584
  %v513 = vsel %vm512, %v465, 0.0
  %v514 = vsel %vm512, %v475, 0.0
  %v515 = vadd.f32 %v513, %v514
  %v516 = vsel %vm512, %v485, 0.0
  %v517 = vadd.f32 %v515, %v516
  %v518 = vsel %vm512, %v495, 0.0
  %v519 = vadd.f32 %v517, %v518
  %520 = vadd.xlane.f32.xlu0 %v519
  %v521 = vpop.xlane.xlu0 %520
  %v522 = vsel %vm512, %v470, 0.0
  %v523 = vsel %vm512, %v480, 0.0
  %v524 = vadd.f32 %v522, %v523
  %v525 = vsel %vm512, %v490, 0.0
  %v526 = vadd.f32 %v524, %v525
  %v527 = vsel %vm512, %v500, 0.0
  %v528 = vadd.f32 %v526, %v527
  %529 = vadd.xlane.f32.xlu0 %v528
  %v530 = vpop.xlane.xlu0 %529
  %v531 = vsel %vm512, %v504, 0.0
  %v532 = vsel %vm512, %v506, 0.0
  %v533 = vadd.f32 %v531, %v532
  %v534 = vsel %vm512, %v508, 0.0
  %v535 = vadd.f32 %v533, %v534
  %v536 = vsel %vm512, %v510, 0.0
  %v537 = vadd.f32 %v535, %v536
  %538 = vadd.xlane.f32.xlu0 %v537
  %v539 = vpop.xlane.xlu0 %538
  %v540 = vsel %vm512, %v505, 0.0
  %v541 = vsel %vm512, %v507, 0.0
  %v542 = vadd.f32 %v540, %v541
  %v543 = vsel %vm512, %v509, 0.0
  %v544 = vadd.f32 %v542, %v543
  %v545 = vsel %vm512, %v511, 0.0
  %v546 = vadd.f32 %v544, %v545
  %547 = vadd.xlane.f32.xlu0 %v546
  %v548 = vpop.xlane.xlu0 %547
  %v549 = vsel %vm503, 1, 0
  %vm550 = vcmp.eq.s32.totalorder %v549, 1
  %v551 = vsel %vm550, %v465, 0.0
  %v552 = vsel %vm550, %v470, 0.0
  %v553 = vsel %vm550, %v475, 0.0
  %v554 = vsel %vm550, %v480, 0.0
  %v555 = vsel %vm550, %v485, 0.0
  %v556 = vsel %vm550, %v490, 0.0
  %v557 = vsel %vm550, %v495, 0.0
  %v558 = vsel %vm550, %v500, 0.0
  %v559 = vsel %vm512, %v551, 0.0
  %v560 = vsel %vm512, %v553, 0.0
  %v561 = vadd.f32 %v559, %v560
  %v562 = vsel %vm512, %v555, 0.0
  %v563 = vadd.f32 %v561, %v562
  %v564 = vsel %vm512, %v557, 0.0
  %v565 = vadd.f32 %v563, %v564
  %566 = vadd.xlane.f32.xlu0 %v565
  %v567 = vpop.xlane.xlu0 %566
  %v568 = vsel %vm512, %v552, 0.0
  %v569 = vsel %vm512, %v554, 0.0
  %v570 = vadd.f32 %v568, %v569
  %v571 = vsel %vm512, %v556, 0.0
  %v572 = vadd.f32 %v570, %v571
  %v573 = vsel %vm512, %v558, 0.0
  %v574 = vadd.f32 %v572, %v573
  %575 = vadd.xlane.f32.xlu0 %v574
  %v576 = vpop.xlane.xlu0 %575
  %v577 = vsel %vm550, %v504, 0.0
  %v578 = vsel %vm550, %v505, 0.0
  %v579 = vsel %vm550, %v506, 0.0
  %v580 = vsel %vm550, %v507, 0.0
  %v581 = vsel %vm550, %v508, 0.0
  %v582 = vsel %vm550, %v509, 0.0
  %v583 = vsel %vm550, %v510, 0.0
  %v584 = vsel %vm550, %v511, 0.0
  %v585 = vsel %vm512, %v577, 0.0
  %v586 = vsel %vm512, %v579, 0.0
  %v587 = vadd.f32 %v585, %v586
  %v588 = vsel %vm512, %v581, 0.0
  %v589 = vadd.f32 %v587, %v588
  %v590 = vsel %vm512, %v583, 0.0
  %v591 = vadd.f32 %v589, %v590
  %592 = vadd.xlane.f32.xlu0 %v591
  %v593 = vpop.xlane.xlu0 %592
  %v594 = vsel %vm512, %v578, 0.0
  %v595 = vsel %vm512, %v580, 0.0
  %v596 = vadd.f32 %v594, %v595
  %v597 = vsel %vm512, %v582, 0.0
  %v598 = vadd.f32 %v596, %v597
  %v599 = vsel %vm512, %v584, 0.0
  %v600 = vadd.f32 %v598, %v599
  %601 = vadd.xlane.f32.xlu0 %v600
  %v602 = vpop.xlane.xlu0 %601
  %v603 = vmul.f32 %v567, 0.03125
  %v604 = vmul.f32 %v576, 0.03125
  %v605 = vsub.f32 %v521, %v567
  %v606 = vsub.f32 %v530, %v576
  %v607 = vmul.f32 %v605, 0.015625
  %v608 = vmul.f32 %v606, 0.015625
  %v609 = vmul.f32 %v593, 0.03125
  %v610 = vmul.f32 %v602, 0.03125
  %v611 = vmul.f32 %v603, %v603
  %v612 = vmul.f32 %v604, %v604
  %v613 = vsub.f32 %v609, %v611
  %v614 = vsub.f32 %v610, %v612
  %v615 = vmax.f32 %v613, 0.0
  %v616 = vmax.f32 %v614, 0.0
  %v617 = vsub.f32 %v539, %v593
  %v618 = vsub.f32 %v548, %v602
  %v619 = vmul.f32 %v617, 0.015625
  %v620 = vmul.f32 %v618, 0.015625
  %v621 = vmul.f32 %v607, %v607
  %v622 = vmul.f32 %v608, %v608
  %v623 = vsub.f32 %v619, %v621
  %v624 = vsub.f32 %v620, %v622
  %v625 = vmax.f32 %v623, 0.0
  %v626 = vmax.f32 %v624, 0.0
  %v627 = vsel %vm550, %v603, %v607
  %v628 = vsel %vm550, %v604, %v608
  %v629 = vsel %vm550, %v615, %v625
  %v630 = vsel %vm550, %v616, %v626
  %v631 = vsub.f32 %v465, %v627
  %v632 = vsub.f32 %v470, %v628
  %v633 = vsub.f32 %v475, %v627
  %v634 = vsub.f32 %v480, %v628
  %v635 = vsub.f32 %v485, %v627
  %v636 = vsub.f32 %v490, %v628
  %v637 = vsub.f32 %v495, %v627
  %v638 = vsub.f32 %v500, %v628
  %v639 = vadd.f32 %v629, 1e-05
  %v640 = vadd.f32 %v630, 1e-05
  %v641 = vrsqrt.pop %v639
  %v642 = vrsqrt.pop %v640
  %v643 = vmul.f32 %v631, %v641
  %v644 = vmul.f32 %v632, %v642
  %v645 = vmul.f32 %v633, %v641
  %v646 = vmul.f32 %v634, %v642
  %v647 = vmul.f32 %v635, %v641
  %v648 = vmul.f32 %v636, %v642
  %v649 = vmul.f32 %v637, %v641
  %v650 = vmul.f32 %v638, %v642
  %vm651 = vcmp.ge.f32.partialorder %v643, 0.0
  %vm652 = vcmp.ge.f32.partialorder %v644, 0.0
  %vm653 = vcmp.ge.f32.partialorder %v645, 0.0
  %vm654 = vcmp.ge.f32.partialorder %v646, 0.0
  %vm655 = vcmp.ge.f32.partialorder %v647, 0.0
  %vm656 = vcmp.ge.f32.partialorder %v648, 0.0
  %vm657 = vcmp.ge.f32.partialorder %v649, 0.0
  %vm658 = vcmp.ge.f32.partialorder %v650, 0.0
  %v659 = vmul.f32 %v643, 0.01
  %v660 = vmul.f32 %v644, 0.01
  %v661 = vmul.f32 %v645, 0.01
  %v662 = vmul.f32 %v646, 0.01
  %v663 = vmul.f32 %v647, 0.01
  %v664 = vmul.f32 %v648, 0.01
  %v665 = vmul.f32 %v649, 0.01
  %v666 = vmul.f32 %v650, 0.01
  %v667 = vsel %vm651, %v643, %v659
  %v668 = vsel %vm652, %v644, %v660
  %v669 = vsel %vm653, %v645, %v661
  %v670 = vsel %vm654, %v646, %v662
  %v671 = vsel %vm655, %v647, %v663
  %v672 = vsel %vm656, %v648, %v664
  %v673 = vsel %vm657, %v649, %v665
  %v674 = vsel %vm658, %v650, %v666
  %v675 = vld [vmem:[%s1 + $0x40] sm:$0xff]
  %v676 = vld [vmem:[%s1 + $0x48] sm:$0xff]
  %v677 = vld [vmem:[%s1 + $0x50] sm:$0xff]
  %v679 = vsel %vm512, %v667, 0
  %v682 = vsel %vm512, %v668, 0
  %v685 = vsel %vm512, %v669, 0
  %v688 = vsel %vm512, %v670, 0
  %v691 = vsel %vm512, %v671, 0
  %v694 = vsel %vm512, %v672, 0
  %v697 = vsel %vm512, %v673, 0
  %v700 = vsel %vm512, %v674, 0
  %702 = vmatprep.subr.mxu0 0.0
  %703 = vmatpush1.msra.mxu0 0.0
  %704 = vmatprep.subr.mxu0 0.0
  %705 = vmatpush1.msra.mxu0 0.0
  %706 = vmatprep.subr.mxu0 0.0
  %707 = vmatpush1.msra.mxu0 0.0
  %708 = vmatprep.subr.mxu0 0.0
  %709 = vmatpush1.msra.mxu0 0.0
  %710 = vmatprep.subr.mxu0 0.0
  %711 = vmatpush1.msra.mxu0 0.0
  %712 = vmatprep.subr.mxu0 0.0
  %713 = vmatpush1.msra.mxu0 0.0
  %714 = vmatprep.subr.mxu0 0.0
  %715 = vmatpush1.msra.mxu0 0.0
  %716 = vmatprep.subr.mxu0 0.0
  %717 = vmatpush1.msra.mxu0 0.0
  %718 = vmatprep.subr.mxu0 0.0
  %719 = vmatpush1.msra.mxu0 0.0
  %720 = vmatprep.subr.mxu0 0.0
  %721 = vmatpush1.msra.mxu0 0.0
  %722 = vmatprep.subr.mxu0 0.0
  %723 = vmatpush1.msra.mxu0 0.0
  %724 = vmatprep.subr.mxu0 0.0
  %725 = vmatpush1.msra.mxu0 0.0
  %726 = vmatprep.subr.mxu0 0.0
  %727 = vmatpush1.msra.mxu0 0.0
  %728 = vmatprep.subr.mxu0 0.0
  %729 = vmatpush1.msra.mxu0 %v677
  %730 = vmatprep.subr.mxu0 0.0
  %731 = vmatpush1.msra.mxu0 %v676
  %732 = vmatprep.subr.mxu0 0.0
  %733 = vmatpush1.msra.mxu0 %v675
  %734 = vmatprep.subr.mxu0 0.0
  %735 = vmatpush2.msra.mxu0 0.0
  %736 = vmatprep.subr.mxu0 0.0
  %737 = vmatpush2.msra.mxu0 0.0
  %738 = vmatprep.subr.mxu0 0.0
  %739 = vmatpush2.msra.mxu0 0.0
  %740 = vmatprep.subr.mxu0 0.0
  %741 = vmatpush2.msra.mxu0 0.0
  %742 = vmatprep.subr.mxu0 0.0
  %743 = vmatpush2.msra.mxu0 0.0
  %744 = vmatprep.subr.mxu0 0.0
  %745 = vmatpush2.msra.mxu0 0.0
  %746 = vmatprep.subr.mxu0 0.0
  %747 = vmatpush2.msra.mxu0 0.0
  %748 = vmatprep.subr.mxu0 0.0
  %749 = vmatpush2.msra.mxu0 0.0
  %750 = vmatprep.subr.mxu0 0.0
  %751 = vmatpush2.msra.mxu0 0.0
  %752 = vmatprep.subr.mxu0 0.0
  %753 = vmatpush2.msra.mxu0 0.0
  %754 = vmatprep.subr.mxu0 0.0
  %755 = vmatpush2.msra.mxu0 0.0
  %756 = vmatprep.subr.mxu0 0.0
  %757 = vmatpush2.msra.mxu0 0.0
  %758 = vmatprep.subr.mxu0 0.0
  %759 = vmatpush2.msra.mxu0 0.0
  %760 = vmatprep.subr.mxu0 0.0
  %761 = vmatpush2.msra.mxu0 0.0
  %762 = vmatprep.subr.mxu0 0.0
  %763 = vmatpush2.msra.mxu0 0.0
  %764 = vmatprep.subr.mxu0 0.0
  %765 = vmatpush2.msra.mxu0 0.0
  %766 = vmatprep.mubr.f32.mxu0 0.0
  %767 = vmatmul.mubr.f32.gmra.mxu0 %v679
  %v768 = vpop.f32.mrf.mxu0
  %v769 = vadd.f32 0.0, %v768
  %v770 = vpop.f32.mrf.mxu0
  %771 = vmatprep.mubr.f32.mxu0 0.0
  %772 = vmatmul.mubr.f32.gmra.mxu0 %v682
  %v773 = vpop.f32.mrf.mxu0
  %v774 = vadd.f32 0.0, %v773
  %v775 = vpop.f32.mrf.mxu0
  %776 = vmatprep.mubr.f32.mxu0 0.0
  %777 = vmatmul.mubr.f32.gmra.mxu0 %v685
  %v778 = vpop.f32.mrf.mxu0
  %v779 = vadd.f32 0.0, %v778
  %v780 = vpop.f32.mrf.mxu0
  %781 = vmatprep.mubr.f32.mxu0 0.0
  %782 = vmatmul.mubr.f32.gmra.mxu0 %v688
  %v783 = vpop.f32.mrf.mxu0
  %v784 = vadd.f32 0.0, %v783
  %v785 = vpop.f32.mrf.mxu0
  %786 = vmatprep.mubr.f32.mxu0 0.0
  %787 = vmatmul.mubr.f32.gmra.mxu0 %v691
  %v788 = vpop.f32.mrf.mxu0
  %v789 = vadd.f32 0.0, %v788
  %v790 = vpop.f32.mrf.mxu0
  %791 = vmatprep.mubr.f32.mxu0 0.0
  %792 = vmatmul.mubr.f32.gmra.mxu0 %v694
  %v793 = vpop.f32.mrf.mxu0
  %v794 = vadd.f32 0.0, %v793
  %v795 = vpop.f32.mrf.mxu0
  %796 = vmatprep.mubr.f32.mxu0 0.0
  %797 = vmatmul.mubr.f32.gmra.mxu0 %v697
  %v798 = vpop.f32.mrf.mxu0
  %v799 = vadd.f32 0.0, %v798
  %v800 = vpop.f32.mrf.mxu0
  %801 = vmatprep.mubr.f32.mxu0 0.0
  %802 = vmatmul.mubr.f32.gmra.mxu0 %v700
  %v803 = vpop.f32.mrf.mxu0
  %v804 = vadd.f32 0.0, %v803
  %v805 = vpop.f32.mrf.mxu0
  %806 = vdwg.mxu0
  %vm807 = vcmp.lt.s32.totalorder %v23, 32
  %v808 = vmul.f32 %v769, %v769
  %v809 = vmul.f32 %v774, %v774
  %v810 = vmul.f32 %v779, %v779
  %v811 = vmul.f32 %v784, %v784
  %v812 = vmul.f32 %v789, %v789
  %v813 = vmul.f32 %v794, %v794
  %v814 = vmul.f32 %v799, %v799
  %v815 = vmul.f32 %v804, %v804
  %vm816 = vcmask 523264
  %v817 = vsel %vm816, %v769, 0.0
  %v818 = vsel %vm816, %v779, 0.0
  %v819 = vadd.f32 %v817, %v818
  %v820 = vsel %vm816, %v789, 0.0
  %v821 = vadd.f32 %v819, %v820
  %v822 = vsel %vm816, %v799, 0.0
  %v823 = vadd.f32 %v821, %v822
  %824 = vadd.xlane.f32.xlu0 %v823
  %v825 = vpop.xlane.xlu0 %824
  %v826 = vsel %vm816, %v774, 0.0
  %v827 = vsel %vm816, %v784, 0.0
  %v828 = vadd.f32 %v826, %v827
  %v829 = vsel %vm816, %v794, 0.0
  %v830 = vadd.f32 %v828, %v829
  %v831 = vsel %vm816, %v804, 0.0
  %v832 = vadd.f32 %v830, %v831
  %833 = vadd.xlane.f32.xlu0 %v832
  %v834 = vpop.xlane.xlu0 %833
  %v835 = vsel %vm816, %v808, 0.0
  %v836 = vsel %vm816, %v810, 0.0
  %v837 = vadd.f32 %v835, %v836
  %v838 = vsel %vm816, %v812, 0.0
  %v839 = vadd.f32 %v837, %v838
  %v840 = vsel %vm816, %v814, 0.0
  %v841 = vadd.f32 %v839, %v840
  %842 = vadd.xlane.f32.xlu0 %v841
  %v843 = vpop.xlane.xlu0 %842
  %v844 = vsel %vm816, %v809, 0.0
  %v845 = vsel %vm816, %v811, 0.0
  %v846 = vadd.f32 %v844, %v845
  %v847 = vsel %vm816, %v813, 0.0
  %v848 = vadd.f32 %v846, %v847
  %v849 = vsel %vm816, %v815, 0.0
  %v850 = vadd.f32 %v848, %v849
  %851 = vadd.xlane.f32.xlu0 %v850
  %v852 = vpop.xlane.xlu0 %851
  %v853 = vsel %vm807, 1, 0
  %vm854 = vcmp.eq.s32.totalorder %v853, 1
  %v855 = vsel %vm854, %v769, 0.0
  %v856 = vsel %vm854, %v774, 0.0
  %v857 = vsel %vm854, %v779, 0.0
  %v858 = vsel %vm854, %v784, 0.0
  %v859 = vsel %vm854, %v789, 0.0
  %v860 = vsel %vm854, %v794, 0.0
  %v861 = vsel %vm854, %v799, 0.0
  %v862 = vsel %vm854, %v804, 0.0
  %v863 = vsel %vm816, %v855, 0.0
  %v864 = vsel %vm816, %v857, 0.0
  %v865 = vadd.f32 %v863, %v864
  %v866 = vsel %vm816, %v859, 0.0
  %v867 = vadd.f32 %v865, %v866
  %v868 = vsel %vm816, %v861, 0.0
  %v869 = vadd.f32 %v867, %v868
  %870 = vadd.xlane.f32.xlu0 %v869
  %v871 = vpop.xlane.xlu0 %870
  %v872 = vsel %vm816, %v856, 0.0
  %v873 = vsel %vm816, %v858, 0.0
  %v874 = vadd.f32 %v872, %v873
  %v875 = vsel %vm816, %v860, 0.0
  %v876 = vadd.f32 %v874, %v875
  %v877 = vsel %vm816, %v862, 0.0
  %v878 = vadd.f32 %v876, %v877
  %879 = vadd.xlane.f32.xlu0 %v878
  %v880 = vpop.xlane.xlu0 %879
  %v881 = vsel %vm854, %v808, 0.0
  %v882 = vsel %vm854, %v809, 0.0
  %v883 = vsel %vm854, %v810, 0.0
  %v884 = vsel %vm854, %v811, 0.0
  %v885 = vsel %vm854, %v812, 0.0
  %v886 = vsel %vm854, %v813, 0.0
  %v887 = vsel %vm854, %v814, 0.0
  %v888 = vsel %vm854, %v815, 0.0
  %v889 = vsel %vm816, %v881, 0.0
  %v890 = vsel %vm816, %v883, 0.0
  %v891 = vadd.f32 %v889, %v890
  %v892 = vsel %vm816, %v885, 0.0
  %v893 = vadd.f32 %v891, %v892
  %v894 = vsel %vm816, %v887, 0.0
  %v895 = vadd.f32 %v893, %v894
  %896 = vadd.xlane.f32.xlu0 %v895
  %v897 = vpop.xlane.xlu0 %896
  %v898 = vsel %vm816, %v882, 0.0
  %v899 = vsel %vm816, %v884, 0.0
  %v900 = vadd.f32 %v898, %v899
  %v901 = vsel %vm816, %v886, 0.0
  %v902 = vadd.f32 %v900, %v901
  %v903 = vsel %vm816, %v888, 0.0
  %v904 = vadd.f32 %v902, %v903
  %905 = vadd.xlane.f32.xlu0 %v904
  %v906 = vpop.xlane.xlu0 %905
  %v907 = vmul.f32 %v871, 0.0078125
  %v908 = vmul.f32 %v880, 0.0078125
  %v909 = vsub.f32 %v825, %v871
  %v910 = vsub.f32 %v834, %v880
  %v911 = vmul.f32 %v909, 0.0078125
  %v912 = vmul.f32 %v910, 0.0078125
  %v913 = vmul.f32 %v897, 0.0078125
  %v914 = vmul.f32 %v906, 0.0078125
  %v915 = vmul.f32 %v907, %v907
  %v916 = vmul.f32 %v908, %v908
  %v917 = vsub.f32 %v913, %v915
  %v918 = vsub.f32 %v914, %v916
  %v919 = vmax.f32 %v917, 0.0
  %v920 = vmax.f32 %v918, 0.0
  %v921 = vsub.f32 %v843, %v897
  %v922 = vsub.f32 %v852, %v906
  %v923 = vmul.f32 %v921, 0.0078125
  %v924 = vmul.f32 %v922, 0.0078125
  %v925 = vmul.f32 %v911, %v911
  %v926 = vmul.f32 %v912, %v912
  %v927 = vsub.f32 %v923, %v925
  %v928 = vsub.f32 %v924, %v926
  %v929 = vmax.f32 %v927, 0.0
  %v930 = vmax.f32 %v928, 0.0
  %v931 = vsel %vm854, %v907, %v911
  %v932 = vsel %vm854, %v908, %v912
  %v933 = vsel %vm854, %v919, %v929
  %v934 = vsel %vm854, %v920, %v930
  %v935 = vsub.f32 %v769, %v931
  %v936 = vsub.f32 %v774, %v932
  %v937 = vsub.f32 %v779, %v931
  %v938 = vsub.f32 %v784, %v932
  %v939 = vsub.f32 %v789, %v931
  %v940 = vsub.f32 %v794, %v932
  %v941 = vsub.f32 %v799, %v931
  %v942 = vsub.f32 %v804, %v932
  %v943 = vadd.f32 %v933, 1e-05
  %v944 = vadd.f32 %v934, 1e-05
  %v945 = vrsqrt.pop %v943
  %v946 = vrsqrt.pop %v944
  %v947 = vmul.f32 %v935, %v945
  %v948 = vmul.f32 %v936, %v946
  %v949 = vmul.f32 %v937, %v945
  %v950 = vmul.f32 %v938, %v946
  %v951 = vmul.f32 %v939, %v945
  %v952 = vmul.f32 %v940, %v946
  %v953 = vmul.f32 %v941, %v945
  %v954 = vmul.f32 %v942, %v946
  %vm955 = vcmp.ge.f32.partialorder %v947, 0.0
  %vm956 = vcmp.ge.f32.partialorder %v948, 0.0
  %vm957 = vcmp.ge.f32.partialorder %v949, 0.0
  %vm958 = vcmp.ge.f32.partialorder %v950, 0.0
  %vm959 = vcmp.ge.f32.partialorder %v951, 0.0
  %vm960 = vcmp.ge.f32.partialorder %v952, 0.0
  %vm961 = vcmp.ge.f32.partialorder %v953, 0.0
  %vm962 = vcmp.ge.f32.partialorder %v954, 0.0
  %v963 = vmul.f32 %v947, 0.01
  %v964 = vmul.f32 %v948, 0.01
  %v965 = vmul.f32 %v949, 0.01
  %v966 = vmul.f32 %v950, 0.01
  %v967 = vmul.f32 %v951, 0.01
  %v968 = vmul.f32 %v952, 0.01
  %v969 = vmul.f32 %v953, 0.01
  %v970 = vmul.f32 %v954, 0.01
  %v971 = vsel %vm955, %v947, %v963
  %v972 = vsel %vm956, %v948, %v964
  %v973 = vsel %vm957, %v949, %v965
  %v974 = vsel %vm958, %v950, %v966
  %v975 = vsel %vm959, %v951, %v967
  %v976 = vsel %vm960, %v952, %v968
  %v977 = vsel %vm961, %v953, %v969
  %v978 = vsel %vm962, %v954, %v970
  %v979 = vmul.f32 %v971, %v971
  %v980 = vmul.f32 %v972, %v972
  %v981 = vmul.f32 %v973, %v973
  %v982 = vmul.f32 %v974, %v974
  %v983 = vmul.f32 %v975, %v975
  %v984 = vmul.f32 %v976, %v976
  %v985 = vmul.f32 %v977, %v977
  %v986 = vmul.f32 %v978, %v978
  %v987 = vsel %vm816, %v979, 0.0
  %v988 = vsel %vm816, %v980, 0.0
  %v989 = vadd.f32 %v987, %v988
  %v990 = vrot.slane %v989, 4
  %v991 = vadd.f32 %v989, %v990
  %v992 = vrot.slane %v991, 2
  %v993 = vadd.f32 %v991, %v992
  %v994 = vrot.slane %v993, 1
  %v995 = vadd.f32 %v993, %v994
  %v996 = vsel %vm816, %v981, 0.0
  %v997 = vsel %vm816, %v982, 0.0
  %v998 = vadd.f32 %v996, %v997
  %v999 = vrot.slane %v998, 4
  %v1000 = vadd.f32 %v998, %v999
  %v1001 = vrot.slane %v1000, 2
  %v1002 = vadd.f32 %v1000, %v1001
  %v1003 = vrot.slane %v1002, 1
  %v1004 = vadd.f32 %v1002, %v1003
  %v1005 = vsel %vm816, %v983, 0.0
  %v1006 = vsel %vm816, %v984, 0.0
  %v1007 = vadd.f32 %v1005, %v1006
  %v1008 = vrot.slane %v1007, 4
  %v1009 = vadd.f32 %v1007, %v1008
  %v1010 = vrot.slane %v1009, 2
  %v1011 = vadd.f32 %v1009, %v1010
  %v1012 = vrot.slane %v1011, 1
  %v1013 = vadd.f32 %v1011, %v1012
  %v1014 = vsel %vm816, %v985, 0.0
  %v1015 = vsel %vm816, %v986, 0.0
  %v1016 = vadd.f32 %v1014, %v1015
  %v1017 = vrot.slane %v1016, 4
  %v1018 = vadd.f32 %v1016, %v1017
  %v1019 = vrot.slane %v1018, 2
  %v1020 = vadd.f32 %v1018, %v1019
  %v1021 = vrot.slane %v1020, 1
  %v1022 = vadd.f32 %v1020, %v1021
  %v1023 = vmax.f32 %v995, 1e-24
  %v1024 = vmax.f32 %v1004, 1e-24
  %v1025 = vmax.f32 %v1013, 1e-24
  %v1026 = vmax.f32 %v1022, 1e-24
  %v1027 = vrsqrt.pop %v1023
  %v1028 = vrsqrt.pop %v1024
  %v1029 = vrsqrt.pop %v1025
  %v1030 = vrsqrt.pop %v1026
  %v1031 = vmul.f32 %v971, %v1027
  %v1032 = vmul.f32 %v972, %v1027
  %v1033 = vmul.f32 %v973, %v1028
  %v1034 = vmul.f32 %v974, %v1028
  %v1035 = vmul.f32 %v975, %v1029
  %v1036 = vmul.f32 %v976, %v1029
  %v1037 = vmul.f32 %v977, %v1030
  %v1038 = vmul.f32 %v978, %v1030
  %1041 = vrot.lane.b32.xlu0 %v1031, 96
  %v1042 = vpop.permute.xlu0 %1041
  %1043 = vrot.lane.b32.xlu0 %v1032, 96
  %v1044 = vpop.permute.xlu0 %1043
  %vm1045 = vcmask 261120
  %v1046 = vsel %vm1045, %v1031, 0
  %v1048 = vsel %vm1045, %v1032, 0
  %v1050 = vsel %vm1045, %v1042, 0
  %v1052 = vsel %vm1045, %v1044, 0
  %1054 = vmatprep.subr.mxu0 0.0
  %1055 = vmatpush1.xpose.msra.mxu0 0.0
  %1056 = vmatprep.subr.mxu0 0.0
  %1057 = vmatpush1.xpose.msra.mxu0 0.0
  %1058 = vmatprep.subr.mxu0 0.0
  %1059 = vmatpush1.xpose.msra.mxu0 0.0
  %1060 = vmatprep.subr.mxu0 0.0
  %1061 = vmatpush1.xpose.msra.mxu0 0.0
  %1062 = vmatprep.subr.mxu0 0.0
  %1063 = vmatpush1.xpose.msra.mxu0 0.0
  %1064 = vmatprep.subr.mxu0 0.0
  %1065 = vmatpush1.xpose.msra.mxu0 0.0
  %1066 = vmatprep.subr.mxu0 0.0
  %1067 = vmatpush1.xpose.msra.mxu0 0.0
  %1068 = vmatprep.subr.mxu0 0.0
  %1069 = vmatpush1.xpose.msra.mxu0 0.0
  %1070 = vmatprep.subr.mxu0 0.0
  %1071 = vmatpush1.xpose.msra.mxu0 0.0
  %1072 = vmatprep.subr.mxu0 0.0
  %1073 = vmatpush1.xpose.msra.mxu0 0.0
  %1074 = vmatprep.subr.mxu0 0.0
  %1075 = vmatpush1.xpose.msra.mxu0 0.0
  %1076 = vmatprep.subr.mxu0 0.0
  %1077 = vmatpush1.xpose.msra.mxu0 0.0
  %1078 = vmatprep.subr.mxu0 0.0
  %1079 = vmatpush1.xpose.msra.mxu0 0.0
  %1080 = vmatprep.subr.mxu0 0.0
  %1081 = vmatpush1.xpose.msra.mxu0 0.0
  %1082 = vmatprep.subr.mxu0 0.0
  %1083 = vmatpush1.xpose.msra.mxu0 %v1052
  %1084 = vmatprep.subr.mxu0 0.0
  %1085 = vmatpush1.xpose.msra.mxu0 %v1050
  %1086 = vmatprep.subr.mxu0 0.0
  %1087 = vmatpush2.xpose.msra.mxu0 0.0
  %1088 = vmatprep.subr.mxu0 0.0
  %1089 = vmatpush2.xpose.msra.mxu0 0.0
  %1090 = vmatprep.subr.mxu0 0.0
  %1091 = vmatpush2.xpose.msra.mxu0 0.0
  %1092 = vmatprep.subr.mxu0 0.0
  %1093 = vmatpush2.xpose.msra.mxu0 0.0
  %1094 = vmatprep.subr.mxu0 0.0
  %1095 = vmatpush2.xpose.msra.mxu0 0.0
  %1096 = vmatprep.subr.mxu0 0.0
  %1097 = vmatpush2.xpose.msra.mxu0 0.0
  %1098 = vmatprep.subr.mxu0 0.0
  %1099 = vmatpush2.xpose.msra.mxu0 0.0
  %1100 = vmatprep.subr.mxu0 0.0
  %1101 = vmatpush2.xpose.msra.mxu0 0.0
  %1102 = vmatprep.subr.mxu0 0.0
  %1103 = vmatpush2.xpose.msra.mxu0 0.0
  %1104 = vmatprep.subr.mxu0 0.0
  %1105 = vmatpush2.xpose.msra.mxu0 0.0
  %1106 = vmatprep.subr.mxu0 0.0
  %1107 = vmatpush2.xpose.msra.mxu0 0.0
  %1108 = vmatprep.subr.mxu0 0.0
  %1109 = vmatpush2.xpose.msra.mxu0 0.0
  %1110 = vmatprep.subr.mxu0 0.0
  %1111 = vmatpush2.xpose.msra.mxu0 0.0
  %1112 = vmatprep.subr.mxu0 0.0
  %1113 = vmatpush2.xpose.msra.mxu0 0.0
  %1114 = vmatprep.subr.mxu0 0.0
  %1115 = vmatpush2.xpose.msra.mxu0 0.0
  %1116 = vmatprep.subr.mxu0 0.0
  %1117 = vmatpush2.xpose.msra.mxu0 0.0
  %1118 = vmatprep.mubr.f32.mxu0 0.0
  %1119 = vmatmul.mubr.f32.gmra.mxu0 %v1046
  %v1120 = vpop.f32.mrf.mxu0
  %v1121 = vadd.f32 0.0, %v1120
  %v1122 = vpop.f32.mrf.mxu0
  %1123 = vmatprep.mubr.f32.mxu0 0.0
  %1124 = vmatmul.mubr.f32.gmra.mxu0 %v1048
  %v1125 = vpop.f32.mrf.mxu0
  %v1126 = vadd.f32 0.0, %v1125
  %v1127 = vpop.f32.mrf.mxu0
  %1128 = vdwg.mxu0
  %1131 = vrot.lane.b32.xlu0 %v1033, 96
  %v1132 = vpop.permute.xlu0 %1131
  %1133 = vrot.lane.b32.xlu0 %v1034, 96
  %v1134 = vpop.permute.xlu0 %1133
  %v1135 = vsel %vm1045, %v1033, 0
  %v1137 = vsel %vm1045, %v1034, 0
  %v1139 = vsel %vm1045, %v1132, 0
  %v1141 = vsel %vm1045, %v1134, 0
  %1143 = vmatprep.subr.mxu0 0.0
  %1144 = vmatpush1.xpose.msra.mxu0 0.0
  %1145 = vmatprep.subr.mxu0 0.0
  %1146 = vmatpush1.xpose.msra.mxu0 0.0
  %1147 = vmatprep.subr.mxu0 0.0
  %1148 = vmatpush1.xpose.msra.mxu0 0.0
  %1149 = vmatprep.subr.mxu0 0.0
  %1150 = vmatpush1.xpose.msra.mxu0 0.0
  %1151 = vmatprep.subr.mxu0 0.0
  %1152 = vmatpush1.xpose.msra.mxu0 0.0
  %1153 = vmatprep.subr.mxu0 0.0
  %1154 = vmatpush1.xpose.msra.mxu0 0.0
  %1155 = vmatprep.subr.mxu0 0.0
  %1156 = vmatpush1.xpose.msra.mxu0 0.0
  %1157 = vmatprep.subr.mxu0 0.0
  %1158 = vmatpush1.xpose.msra.mxu0 0.0
  %1159 = vmatprep.subr.mxu0 0.0
  %1160 = vmatpush1.xpose.msra.mxu0 0.0
  %1161 = vmatprep.subr.mxu0 0.0
  %1162 = vmatpush1.xpose.msra.mxu0 0.0
  %1163 = vmatprep.subr.mxu0 0.0
  %1164 = vmatpush1.xpose.msra.mxu0 0.0
  %1165 = vmatprep.subr.mxu0 0.0
  %1166 = vmatpush1.xpose.msra.mxu0 0.0
  %1167 = vmatprep.subr.mxu0 0.0
  %1168 = vmatpush1.xpose.msra.mxu0 0.0
  %1169 = vmatprep.subr.mxu0 0.0
  %1170 = vmatpush1.xpose.msra.mxu0 0.0
  %1171 = vmatprep.subr.mxu0 0.0
  %1172 = vmatpush1.xpose.msra.mxu0 %v1141
  %1173 = vmatprep.subr.mxu0 0.0
  %1174 = vmatpush1.xpose.msra.mxu0 %v1139
  %1175 = vmatprep.subr.mxu0 0.0
  %1176 = vmatpush2.xpose.msra.mxu0 0.0
  %1177 = vmatprep.subr.mxu0 0.0
  %1178 = vmatpush2.xpose.msra.mxu0 0.0
  %1179 = vmatprep.subr.mxu0 0.0
  %1180 = vmatpush2.xpose.msra.mxu0 0.0
  %1181 = vmatprep.subr.mxu0 0.0
  %1182 = vmatpush2.xpose.msra.mxu0 0.0
  %1183 = vmatprep.subr.mxu0 0.0
  %1184 = vmatpush2.xpose.msra.mxu0 0.0
  %1185 = vmatprep.subr.mxu0 0.0
  %1186 = vmatpush2.xpose.msra.mxu0 0.0
  %1187 = vmatprep.subr.mxu0 0.0
  %1188 = vmatpush2.xpose.msra.mxu0 0.0
  %1189 = vmatprep.subr.mxu0 0.0
  %1190 = vmatpush2.xpose.msra.mxu0 0.0
  %1191 = vmatprep.subr.mxu0 0.0
  %1192 = vmatpush2.xpose.msra.mxu0 0.0
  %1193 = vmatprep.subr.mxu0 0.0
  %1194 = vmatpush2.xpose.msra.mxu0 0.0
  %1195 = vmatprep.subr.mxu0 0.0
  %1196 = vmatpush2.xpose.msra.mxu0 0.0
  %1197 = vmatprep.subr.mxu0 0.0
  %1198 = vmatpush2.xpose.msra.mxu0 0.0
  %1199 = vmatprep.subr.mxu0 0.0
  %1200 = vmatpush2.xpose.msra.mxu0 0.0
  %1201 = vmatprep.subr.mxu0 0.0
  %1202 = vmatpush2.xpose.msra.mxu0 0.0
  %1203 = vmatprep.subr.mxu0 0.0
  %1204 = vmatpush2.xpose.msra.mxu0 0.0
  %1205 = vmatprep.subr.mxu0 0.0
  %1206 = vmatpush2.xpose.msra.mxu0 0.0
  %1207 = vmatprep.mubr.f32.mxu0 0.0
  %1208 = vmatmul.mubr.f32.gmra.mxu0 %v1135
  %v1209 = vpop.f32.mrf.mxu0
  %v1210 = vadd.f32 0.0, %v1209
  %v1211 = vpop.f32.mrf.mxu0
  %1212 = vmatprep.mubr.f32.mxu0 0.0
  %1213 = vmatmul.mubr.f32.gmra.mxu0 %v1137
  %v1214 = vpop.f32.mrf.mxu0
  %v1215 = vadd.f32 0.0, %v1214
  %v1216 = vpop.f32.mrf.mxu0
  %1217 = vdwg.mxu0
  %1220 = vrot.lane.b32.xlu0 %v1035, 96
  %v1221 = vpop.permute.xlu0 %1220
  %1222 = vrot.lane.b32.xlu0 %v1036, 96
  %v1223 = vpop.permute.xlu0 %1222
  %v1224 = vsel %vm1045, %v1035, 0
  %v1226 = vsel %vm1045, %v1036, 0
  %v1228 = vsel %vm1045, %v1221, 0
  %v1230 = vsel %vm1045, %v1223, 0
  %1232 = vmatprep.subr.mxu0 0.0
  %1233 = vmatpush1.xpose.msra.mxu0 0.0
  %1234 = vmatprep.subr.mxu0 0.0
  %1235 = vmatpush1.xpose.msra.mxu0 0.0
  %1236 = vmatprep.subr.mxu0 0.0
  %1237 = vmatpush1.xpose.msra.mxu0 0.0
  %1238 = vmatprep.subr.mxu0 0.0
  %1239 = vmatpush1.xpose.msra.mxu0 0.0
  %1240 = vmatprep.subr.mxu0 0.0
  %1241 = vmatpush1.xpose.msra.mxu0 0.0
  %1242 = vmatprep.subr.mxu0 0.0
  %1243 = vmatpush1.xpose.msra.mxu0 0.0
  %1244 = vmatprep.subr.mxu0 0.0
  %1245 = vmatpush1.xpose.msra.mxu0 0.0
  %1246 = vmatprep.subr.mxu0 0.0
  %1247 = vmatpush1.xpose.msra.mxu0 0.0
  %1248 = vmatprep.subr.mxu0 0.0
  %1249 = vmatpush1.xpose.msra.mxu0 0.0
  %1250 = vmatprep.subr.mxu0 0.0
  %1251 = vmatpush1.xpose.msra.mxu0 0.0
  %1252 = vmatprep.subr.mxu0 0.0
  %1253 = vmatpush1.xpose.msra.mxu0 0.0
  %1254 = vmatprep.subr.mxu0 0.0
  %1255 = vmatpush1.xpose.msra.mxu0 0.0
  %1256 = vmatprep.subr.mxu0 0.0
  %1257 = vmatpush1.xpose.msra.mxu0 0.0
  %1258 = vmatprep.subr.mxu0 0.0
  %1259 = vmatpush1.xpose.msra.mxu0 0.0
  %1260 = vmatprep.subr.mxu0 0.0
  %1261 = vmatpush1.xpose.msra.mxu0 %v1230
  %1262 = vmatprep.subr.mxu0 0.0
  %1263 = vmatpush1.xpose.msra.mxu0 %v1228
  %1264 = vmatprep.subr.mxu0 0.0
  %1265 = vmatpush2.xpose.msra.mxu0 0.0
  %1266 = vmatprep.subr.mxu0 0.0
  %1267 = vmatpush2.xpose.msra.mxu0 0.0
  %1268 = vmatprep.subr.mxu0 0.0
  %1269 = vmatpush2.xpose.msra.mxu0 0.0
  %1270 = vmatprep.subr.mxu0 0.0
  %1271 = vmatpush2.xpose.msra.mxu0 0.0
  %1272 = vmatprep.subr.mxu0 0.0
  %1273 = vmatpush2.xpose.msra.mxu0 0.0
  %1274 = vmatprep.subr.mxu0 0.0
  %1275 = vmatpush2.xpose.msra.mxu0 0.0
  %1276 = vmatprep.subr.mxu0 0.0
  %1277 = vmatpush2.xpose.msra.mxu0 0.0
  %1278 = vmatprep.subr.mxu0 0.0
  %1279 = vmatpush2.xpose.msra.mxu0 0.0
  %1280 = vmatprep.subr.mxu0 0.0
  %1281 = vmatpush2.xpose.msra.mxu0 0.0
  %1282 = vmatprep.subr.mxu0 0.0
  %1283 = vmatpush2.xpose.msra.mxu0 0.0
  %1284 = vmatprep.subr.mxu0 0.0
  %1285 = vmatpush2.xpose.msra.mxu0 0.0
  %1286 = vmatprep.subr.mxu0 0.0
  %1287 = vmatpush2.xpose.msra.mxu0 0.0
  %1288 = vmatprep.subr.mxu0 0.0
  %1289 = vmatpush2.xpose.msra.mxu0 0.0
  %1290 = vmatprep.subr.mxu0 0.0
  %1291 = vmatpush2.xpose.msra.mxu0 0.0
  %1292 = vmatprep.subr.mxu0 0.0
  %1293 = vmatpush2.xpose.msra.mxu0 0.0
  %1294 = vmatprep.subr.mxu0 0.0
  %1295 = vmatpush2.xpose.msra.mxu0 0.0
  %1296 = vmatprep.mubr.f32.mxu0 0.0
  %1297 = vmatmul.mubr.f32.gmra.mxu0 %v1224
  %v1298 = vpop.f32.mrf.mxu0
  %v1299 = vadd.f32 0.0, %v1298
  %v1300 = vpop.f32.mrf.mxu0
  %1301 = vmatprep.mubr.f32.mxu0 0.0
  %1302 = vmatmul.mubr.f32.gmra.mxu0 %v1226
  %v1303 = vpop.f32.mrf.mxu0
  %v1304 = vadd.f32 0.0, %v1303
  %v1305 = vpop.f32.mrf.mxu0
  %1306 = vdwg.mxu0
  %1309 = vrot.lane.b32.xlu0 %v1037, 96
  %v1310 = vpop.permute.xlu0 %1309
  %1311 = vrot.lane.b32.xlu0 %v1038, 96
  %v1312 = vpop.permute.xlu0 %1311
  %v1313 = vsel %vm1045, %v1037, 0
  %v1315 = vsel %vm1045, %v1038, 0
  %v1317 = vsel %vm1045, %v1310, 0
  %v1319 = vsel %vm1045, %v1312, 0
  %1321 = vmatprep.subr.mxu0 0.0
  %1322 = vmatpush1.xpose.msra.mxu0 0.0
  %1323 = vmatprep.subr.mxu0 0.0
  %1324 = vmatpush1.xpose.msra.mxu0 0.0
  %1325 = vmatprep.subr.mxu0 0.0
  %1326 = vmatpush1.xpose.msra.mxu0 0.0
  %1327 = vmatprep.subr.mxu0 0.0
  %1328 = vmatpush1.xpose.msra.mxu0 0.0
  %1329 = vmatprep.subr.mxu0 0.0
  %1330 = vmatpush1.xpose.msra.mxu0 0.0
  %1331 = vmatprep.subr.mxu0 0.0
  %1332 = vmatpush1.xpose.msra.mxu0 0.0
  %1333 = vmatprep.subr.mxu0 0.0
  %1334 = vmatpush1.xpose.msra.mxu0 0.0
  %1335 = vmatprep.subr.mxu0 0.0
  %1336 = vmatpush1.xpose.msra.mxu0 0.0
  %1337 = vmatprep.subr.mxu0 0.0
  %1338 = vmatpush1.xpose.msra.mxu0 0.0
  %1339 = vmatprep.subr.mxu0 0.0
  %1340 = vmatpush1.xpose.msra.mxu0 0.0
  %1341 = vmatprep.subr.mxu0 0.0
  %1342 = vmatpush1.xpose.msra.mxu0 0.0
  %1343 = vmatprep.subr.mxu0 0.0
  %1344 = vmatpush1.xpose.msra.mxu0 0.0
  %1345 = vmatprep.subr.mxu0 0.0
  %1346 = vmatpush1.xpose.msra.mxu0 0.0
  %1347 = vmatprep.subr.mxu0 0.0
  %1348 = vmatpush1.xpose.msra.mxu0 0.0
  %1349 = vmatprep.subr.mxu0 0.0
  %1350 = vmatpush1.xpose.msra.mxu0 %v1319
  %1351 = vmatprep.subr.mxu0 0.0
  %1352 = vmatpush1.xpose.msra.mxu0 %v1317
  %1353 = vmatprep.subr.mxu0 0.0
  %1354 = vmatpush2.xpose.msra.mxu0 0.0
  %1355 = vmatprep.subr.mxu0 0.0
  %1356 = vmatpush2.xpose.msra.mxu0 0.0
  %1357 = vmatprep.subr.mxu0 0.0
  %1358 = vmatpush2.xpose.msra.mxu0 0.0
  %1359 = vmatprep.subr.mxu0 0.0
  %1360 = vmatpush2.xpose.msra.mxu0 0.0
  %1361 = vmatprep.subr.mxu0 0.0
  %1362 = vmatpush2.xpose.msra.mxu0 0.0
  %1363 = vmatprep.subr.mxu0 0.0
  %1364 = vmatpush2.xpose.msra.mxu0 0.0
  %1365 = vmatprep.subr.mxu0 0.0
  %1366 = vmatpush2.xpose.msra.mxu0 0.0
  %1367 = vmatprep.subr.mxu0 0.0
  %1368 = vmatpush2.xpose.msra.mxu0 0.0
  %1369 = vmatprep.subr.mxu0 0.0
  %1370 = vmatpush2.xpose.msra.mxu0 0.0
  %1371 = vmatprep.subr.mxu0 0.0
  %1372 = vmatpush2.xpose.msra.mxu0 0.0
  %1373 = vmatprep.subr.mxu0 0.0
  %1374 = vmatpush2.xpose.msra.mxu0 0.0
  %1375 = vmatprep.subr.mxu0 0.0
  %1376 = vmatpush2.xpose.msra.mxu0 0.0
  %1377 = vmatprep.subr.mxu0 0.0
  %1378 = vmatpush2.xpose.msra.mxu0 0.0
  %1379 = vmatprep.subr.mxu0 0.0
  %1380 = vmatpush2.xpose.msra.mxu0 0.0
  %1381 = vmatprep.subr.mxu0 0.0
  %1382 = vmatpush2.xpose.msra.mxu0 0.0
  %1383 = vmatprep.subr.mxu0 0.0
  %1384 = vmatpush2.xpose.msra.mxu0 0.0
  %1385 = vmatprep.mubr.f32.mxu0 0.0
  %1386 = vmatmul.mubr.f32.gmra.mxu0 %v1313
  %v1387 = vpop.f32.mrf.mxu0
  %v1388 = vadd.f32 0.0, %v1387
  %v1389 = vpop.f32.mrf.mxu0
  %1390 = vmatprep.mubr.f32.mxu0 0.0
  %1391 = vmatmul.mubr.f32.gmra.mxu0 %v1315
  %v1392 = vpop.f32.mrf.mxu0
  %v1393 = vadd.f32 0.0, %v1392
  %v1394 = vpop.f32.mrf.mxu0
  %1395 = vdwg.mxu0
  %v1396 = vmul.f32 %v1121, 100.0
  %v1397 = vmul.f32 %v1126, 100.0
  %v1398 = vmul.f32 %v1210, 100.0
  %v1399 = vmul.f32 %v1215, 100.0
  %v1400 = vmul.f32 %v1299, 100.0
  %v1401 = vmul.f32 %v1304, 100.0
  %v1402 = vmul.f32 %v1388, 100.0
  %v1403 = vmul.f32 %v1393, 100.0
  %v1404 = vadd.s32 %v20, %v23
  %v1405 = vadd.s32 %v21, %v23
  %vm1406 = vcmp.eq.s32.totalorder %v1404, 15
  %vm1407 = vcmp.eq.s32.totalorder %v1405, 15
  %v1408 = vsel %vm1406, 1, 0
  %v1409 = vsel %vm1407, 1, 0
  %vm1410 = vcmp.eq.s32.totalorder %v1408, 1
  %vm1411 = vcmp.eq.s32.totalorder %v1409, 1
  %v1412 = vsel %vm1410, %v1396, 0.0
  %v1413 = vsel %vm1411, %v1397, 0.0
  %v1414 = vsel %vm1410, %v1398, 0.0
  %v1415 = vsel %vm1411, %v1399, 0.0
  %v1416 = vsel %vm1410, %v1400, 0.0
  %v1417 = vsel %vm1411, %v1401, 0.0
  %v1418 = vsel %vm1410, %v1402, 0.0
  %v1419 = vsel %vm1411, %v1403, 0.0
  %v1420 = vsel %vm50, %v1412, 0.0
  %v1421 = vsel %vm50, %v1413, 0.0
  %v1422 = vadd.f32 %v1420, %v1421
  %v1423 = vrot.slane %v1422, 4
  %v1424 = vadd.f32 %v1422, %v1423
  %v1425 = vrot.slane %v1424, 2
  %v1426 = vadd.f32 %v1424, %v1425
  %v1427 = vrot.slane %v1426, 1
  %v1428 = vadd.f32 %v1426, %v1427
  %v1429 = vsel %vm50, %v1414, 0.0
  %v1430 = vsel %vm50, %v1415, 0.0
  %v1431 = vadd.f32 %v1429, %v1430
  %v1432 = vrot.slane %v1431, 4
  %v1433 = vadd.f32 %v1431, %v1432
  %v1434 = vrot.slane %v1433, 2
  %v1435 = vadd.f32 %v1433, %v1434
  %v1436 = vrot.slane %v1435, 1
  %v1437 = vadd.f32 %v1435, %v1436
  %v1438 = vsel %vm50, %v1416, 0.0
  %v1439 = vsel %vm50, %v1417, 0.0
  %v1440 = vadd.f32 %v1438, %v1439
  %v1441 = vrot.slane %v1440, 4
  %v1442 = vadd.f32 %v1440, %v1441
  %v1443 = vrot.slane %v1442, 2
  %v1444 = vadd.f32 %v1442, %v1443
  %v1445 = vrot.slane %v1444, 1
  %v1446 = vadd.f32 %v1444, %v1445
  %v1447 = vsel %vm50, %v1418, 0.0
  %v1448 = vsel %vm50, %v1419, 0.0
  %v1449 = vadd.f32 %v1447, %v1448
  %v1450 = vrot.slane %v1449, 4
  %v1451 = vadd.f32 %v1449, %v1450
  %v1452 = vrot.slane %v1451, 2
  %v1453 = vadd.f32 %v1451, %v1452
  %v1454 = vrot.slane %v1453, 1
  %v1455 = vadd.f32 %v1453, %v1454
  %v1456 = vsel %vm1410, -inf, %v1396
  %v1457 = vsel %vm1411, -inf, %v1397
  %v1458 = vsel %vm1410, -inf, %v1398
  %v1459 = vsel %vm1411, -inf, %v1399
  %v1460 = vsel %vm1410, -inf, %v1400
  %v1461 = vsel %vm1411, -inf, %v1401
  %v1462 = vsel %vm1410, -inf, %v1402
  %v1463 = vsel %vm1411, -inf, %v1403
  %v1464 = vsel %vm24, 1, 0
  %v1465 = vsel %vm25, 1, 0
  %vm1466 = vcmp.eq.s32.totalorder %v1464, 1
  %vm1467 = vcmp.eq.s32.totalorder %v1465, 1
  %v1468 = vsel %vm1466, %v1428, %v1456
  %v1469 = vsel %vm1467, %v1428, %v1457
  %v1470 = vsel %vm1466, %v1437, %v1458
  %v1471 = vsel %vm1467, %v1437, %v1459
  %v1472 = vsel %vm1466, %v1446, %v1460
  %v1473 = vsel %vm1467, %v1446, %v1461
  %v1474 = vsel %vm1466, %v1455, %v1462
  %v1475 = vsel %vm1467, %v1455, %v1463
  %vm1476 = vcmask 121856
  %1477 = vst.msk [vmem:[%s2] sm:$0xff] %vm1476, %v1468
  %1478 = vst.msk [vmem:[%s2 + $0x8] sm:$0xff] %vm1476, %v1469
  %1479 = vst.msk [vmem:[%s2 + $0x10] sm:$0xff] %vm1476, %v1470
  %1480 = vst.msk [vmem:[%s2 + $0x18] sm:$0xff] %vm1476, %v1471
  %1481 = vst.msk [vmem:[%s2 + $0x20] sm:$0xff] %vm1476, %v1472
  %1482 = vst.msk [vmem:[%s2 + $0x28] sm:$0xff] %vm1476, %v1473
  %1483 = vst.msk [vmem:[%s2 + $0x30] sm:$0xff] %vm1476, %v1474
  %1484 = vst.msk [vmem:[%s2 + $0x38] sm:$0xff] %vm1476, %v1475
  // Predicated region
  $region10: #{icl_forward.1} parent=0 // pred_check
    _
  $region11: #{icl_forward.1} parent=0 // pred_check_branch
    %1486 = sbr.rel (0) target = $region13
  $region12: #{icl_forward.1} parent=0 // pred_region
    _
  $region13: #{icl_forward.1} parent=0 // pred_fallthru
    _
  // Predicated region
  $region14: #{icl_forward.1} parent=0 // pred_check
    _
  $region15: #{icl_forward.1} parent=0 // pred_check_branch
    %1488 = sbr.rel (0) target = $region17
  $region16: #{icl_forward.1} parent=0 // pred_region
    _
  $region17: #{icl_forward.1} parent=0 // pred_fallthru
    _

</llo_original>
